<compile_context>
chip_gen: v7x
topology: tpu7x:2x2x1
jax: 0.10.0
libtpu: 0.0.40
codegen_flags: <defaults>
</compile_context>

<pallas_src>
import functools

import jax
import jax.numpy as jnp
from jax.experimental import pallas as pl
from jax.experimental.pallas import tpu as pltpu


STEM_K = 32        # 3*3*3 = 27 im2col depth, zero-padded to 32
STEM_CH = 24       # efficientnet_v2_s stem width
HEAD_CH = 1280     # efficientnet_v2_s final feature width
BACKBONE_OUT = 1000
NUM_CLASSES = 2
N_PAD = 128        # lane-padded classifier width (sliced back to NUM_CLASSES)


# ----------------------------------------------------------------------------
# Fused Pallas kernel: stem conv -> SiLU -> head conv -> SiLU -> avg-pool -> classifier
# ----------------------------------------------------------------------------
def _fused_model_kernel(patch_ref, stem_w_ref, stem_b_ref, head_w_ref, head_b_ref,
                        clf_w_ref, clf_b_ref, out_ref, acc_ref, *, inv_hw):
    m = pl.program_id(1)

    @pl.when(m == 0)
    def _init():
        acc_ref[...] = jnp.zeros_like(acc_ref)

    # stem: 3x3 stride-2 conv as matmul over im2col patches + SiLU.
    # [TM, 24] result stays in vregs (never stored lane-sparse to HBM).
    stem = jnp.dot(patch_ref[...], stem_w_ref[...],
                   preferred_element_type=jnp.float32)
    stem = stem + stem_b_ref[...]
    stem = stem * jax.nn.sigmoid(stem)                       # SiLU (EUP + VPU)

    # head: 1x1 conv -> 1280 + SiLU (bf16 MXU inputs, f32 accumulation).
    head = jnp.dot(stem.astype(jnp.bfloat16), head_w_ref[...],
                   preferred_element_type=jnp.float32)
    head = head + head_b_ref[...]
    head = head * jax.nn.sigmoid(head)

    # fused global average pool: accumulate the spatial sum for this image.
    acc_ref[...] += jnp.sum(head, axis=0, keepdims=True)     # [1, 1280]

    @pl.when(m == pl.num_programs(1) - 1)
    def _finalize():
        pooled = acc_ref[...] * inv_hw                       # [1, 1280]
        # folded (fc @ cls) classifier, lane-padded to 128 outputs.
        logits = jnp.dot(pooled.astype(jnp.bfloat16), clf_w_ref[...],
                         preferred_element_type=jnp.float32)
        logits = logits + clf_b_ref[...]                     # [1, 128]
        out_ref[...] = logits.reshape(out_ref.shape).astype(out_ref.dtype)


def _pick_tile_m(hw):
    """Largest multiple-of-16 (fallback 8) divisor of hw, capped at 512."""
    for tm in (512, 256, 128, 64, 32, 16, 8):
        if tm <= hw and hw % tm == 0:
            return tm
    return hw  # TODO(synk): unaligned spatial extent -> single (padded) tile


# ----------------------------------------------------------------------------
# Glue: im2col so the stem conv becomes an in-kernel matmul
# ----------------------------------------------------------------------------
def im2col(x_nhwc, kh, kw, stride, pad):
    B, H, W, C = x_nhwc.shape
    xp = jnp.pad(x_nhwc, ((0, 0), (pad, pad), (pad, pad), (0, 0)))
    Ho = (H + 2 * pad - kh) // stride + 1
    Wo = (W + 2 * pad - kw) // stride + 1
    cols = []
    for i in range(kh):
        for j in range(kw):
            cols.append(
                xp[:, i: i + Ho * stride: stride, j: j + Wo * stride: stride, :]
            )
    patches = jnp.concatenate(cols, axis=-1)          # [B, Ho, Wo, kh*kw*C]
    return patches.reshape(B * Ho * Wo, kh * kw * C), (B, Ho, Wo)


# ----------------------------------------------------------------------------
# Parameters
# ----------------------------------------------------------------------------
def init_params(key):
    ks = jax.random.split(key, 4)

    def w(k, shape, fan_in):
        return jax.random.normal(k, shape, jnp.float32) / jnp.sqrt(fan_in)

    return {
        "stem_w": w(ks[0], (27, STEM_CH), 27.0),
        "stem_b": jnp.zeros((STEM_CH,), jnp.float32),
        "head_w": w(ks[1], (STEM_CH, HEAD_CH), float(STEM_CH)),
        "head_b": jnp.zeros((HEAD_CH,), jnp.float32),
        "fc_w": w(ks[2], (HEAD_CH, BACKBONE_OUT), float(HEAD_CH)),
        "fc_b": jnp.zeros((BACKBONE_OUT,), jnp.float32),
        "cls_w": w(ks[3], (BACKBONE_OUT, NUM_CLASSES), float(BACKBONE_OUT)),
        "cls_b": jnp.zeros((NUM_CLASSES,), jnp.float32),
    }


def prepare_kernel_params(params):
    """Fold / pad / cast the logical params into kernel-ready tensors (done once)."""
    # Exact fold of fc (1280->1000) and cls (1000->2): no nonlinearity in between.
    clf_w = params["fc_w"] @ params["cls_w"]                      # [1280, 2]
    clf_b = params["fc_b"] @ params["cls_w"] + params["cls_b"]    # [2]
    # Lane-pad classifier outputs 2 -> 128 (sliced back in the wrapper).
    clf_w = jnp.pad(clf_w, ((0, 0), (0, N_PAD - NUM_CLASSES)))
    clf_b = jnp.pad(clf_b, ((0, N_PAD - NUM_CLASSES),))
    # Pad stem K 27 -> 32 (matches the zero-padded im2col columns).
    stem_w = jnp.pad(params["stem_w"],
                     ((0, STEM_K - params["stem_w"].shape[0]), (0, 0)))
    return {
        "stem_w": stem_w.astype(jnp.bfloat16),
        "stem_b": params["stem_b"].reshape(1, STEM_CH).astype(jnp.float32),
        "head_w": params["head_w"].astype(jnp.bfloat16),
        "head_b": params["head_b"].reshape(1, HEAD_CH).astype(jnp.float32),
        "clf_w": clf_w.astype(jnp.bfloat16),
        "clf_b": clf_b.reshape(1, N_PAD).astype(jnp.float32),
    }


# ----------------------------------------------------------------------------
# Forward
# ----------------------------------------------------------------------------
@jax.jit
def base_model_forward(kparams, x_nchw):
    # layout: NCHW (PyTorch) -> NHWC for the TPU kernel.
    x = jnp.transpose(x_nchw, (0, 2, 3, 1)).astype(jnp.float32)   # [B, H, W, 3]

    patches, (B, Ho, Wo) = im2col(x, 3, 3, stride=2, pad=1)       # [B*HW, 27]
    patches = jnp.pad(
        patches, ((0, 0), (0, STEM_K - patches.shape[1]))
    ).astype(jnp.bfloat16)                                        # [B*HW, 32]

    HW = Ho * Wo
    TM = _pick_tile_m(HW)
    num_m = HW // TM
    M_total = B * HW

    flops = (2 * M_total * STEM_K * STEM_CH
             + 2 * M_total * STEM_CH * HEAD_CH
             + 2 * B * HEAD_CH * N_PAD)
    transcendentals = M_total * (STEM_CH + HEAD_CH)
    bytes_accessed = (M_total * STEM_K * 2
                      + STEM_K * STEM_CH * 2
                      + STEM_CH * HEAD_CH * 2
                      + HEAD_CH * N_PAD * 2
                      + (STEM_CH + HEAD_CH + N_PAD) * 4
                      + B * N_PAD * 4)

    out = pl.pallas_call(
        functools.partial(_fused_model_kernel, inv_hw=1.0 / float(HW)),
        out_shape=jax.ShapeDtypeStruct((B, 1, N_PAD), jnp.float32),
        grid_spec=pltpu.PrefetchScalarGridSpec(
            num_scalar_prefetch=0,
            grid=(B, num_m),
            in_specs=[
                pl.BlockSpec((TM, STEM_K), lambda b, m: (b * num_m + m, 0)),
                pl.BlockSpec((STEM_K, STEM_CH), lambda b, m: (0, 0)),
                pl.BlockSpec((1, STEM_CH), lambda b, m: (0, 0)),
                pl.BlockSpec((STEM_CH, HEAD_CH), lambda b, m: (0, 0)),
                pl.BlockSpec((1, HEAD_CH), lambda b, m: (0, 0)),
                pl.BlockSpec((HEAD_CH, N_PAD), lambda b, m: (0, 0)),
                pl.BlockSpec((1, N_PAD), lambda b, m: (0, 0)),
            ],
            out_specs=pl.BlockSpec((1, 1, N_PAD), lambda b, m: (b, 0, 0)),
            scratch_shapes=[pltpu.VMEM((1, HEAD_CH), jnp.float32)],
        ),
        compiler_params=pltpu.CompilerParams(
            dimension_semantics=("parallel", "arbitrary"),
        ),
        cost_estimate=pl.CostEstimate(
            flops=flops,
            transcendentals=transcendentals,
            bytes_accessed=bytes_accessed,
        ),
    )(
        patches,
        kparams["stem_w"], kparams["stem_b"],
        kparams["head_w"], kparams["head_b"],
        kparams["clf_w"], kparams["clf_b"],
    )

    logits = out.reshape(B, N_PAD)[:, :NUM_CLASSES]               # [B, 2]
    return logits


if __name__ == "__main__":
    key = jax.random.PRNGKey(0)
    pkey, xkey = jax.random.split(key)
    params = init_params(pkey)
    kparams = prepare_kernel_params(params)

    # Small NCHW RGB input consistent with the module.
    x = jax.random.normal(xkey, (2, 3, 16, 16), jnp.float32)

    out = base_model_forward(kparams, x)
    out = jax.block_until_ready(out)
    assert out.shape == (2, NUM_CLASSES) and out.dtype == jnp.float32
    assert bool(jnp.all(jnp.isfinite(out)))
    print("KERNEL_OK")
</pallas_src>

<mosaic_0001>
module attributes {stable_mosaic.version = 11 : i64} {
  func.func @_fused_model_kernel(%arg0: i32, %arg1: i32, %arg2: memref<64x32xbf16, #tpu.memory_space<vmem>>, %arg3: memref<32x24xbf16, #tpu.memory_space<vmem>>, %arg4: memref<1x24xf32, #tpu.memory_space<vmem>>, %arg5: memref<24x1280xbf16, #tpu.memory_space<vmem>>, %arg6: memref<1x1280xf32, #tpu.memory_space<vmem>>, %arg7: memref<1280x128xbf16, #tpu.memory_space<vmem>>, %arg8: memref<1x128xf32, #tpu.memory_space<vmem>>, %arg9: memref<1x1x128xf32, #tpu.memory_space<vmem>>, %arg10: memref<1x1280xf32, #tpu.memory_space<vmem>>) attributes {dimension_semantics = [#tpu.dimension_semantics<parallel>, #tpu.dimension_semantics<arbitrary>], iteration_bounds = array<i64: 2, 1>, scalar_prefetch = 0 : i64, scratch_operands = 1 : i64, tpu.core_type = #tpu.core_type<tc>, window_params = [{transform_indices = @transform_0, window_bounds = array<i64: 64, 32>}, {pipeline_mode = #tpu.pipeline_mode<synchronous>, transform_indices = @transform_1, window_bounds = array<i64: 32, 24>}, {pipeline_mode = #tpu.pipeline_mode<synchronous>, transform_indices = @transform_2, window_bounds = array<i64: 1, 24>}, {pipeline_mode = #tpu.pipeline_mode<synchronous>, transform_indices = @transform_3, window_bounds = array<i64: 24, 1280>}, {pipeline_mode = #tpu.pipeline_mode<synchronous>, transform_indices = @transform_4, window_bounds = array<i64: 1, 1280>}, {pipeline_mode = #tpu.pipeline_mode<synchronous>, transform_indices = @transform_5, window_bounds = array<i64: 1280, 128>}, {pipeline_mode = #tpu.pipeline_mode<synchronous>, transform_indices = @transform_6, window_bounds = array<i64: 1, 128>}, {transform_indices = @transform_7, window_bounds = array<i64: 1, 1, 128>}]} {
    %c0_i32 = arith.constant 0 : i32
    %0 = arith.cmpi eq, %arg1, %c0_i32 : i32
    %1 = arith.extui %0 : i1 to i32
    %c0_i32_0 = arith.constant 0 : i32
    %2 = arith.cmpi ne, %1, %c0_i32_0 : i32
    scf.if %2 {
      %cst_20 = arith.constant 0.000000e+00 : f32
      %35 = vector.broadcast %cst_20 : f32 to vector<1x1280xf32>
      %c0_21 = arith.constant 0 : index
      %c0_22 = arith.constant 0 : index
      %36 = vector.load %arg10[%c0_21, %c0_22] : memref<1x1280xf32, #tpu.memory_space<vmem>>, vector<1x1280xf32>
      tpu.vector_store %arg10[%c0_21, %c0_22], %35 {strides = array<i32>} : memref<1x1280xf32, #tpu.memory_space<vmem>>, vector<1x1280xf32>,
    } else {
    }
    %c0 = arith.constant 0 : index
    %c0_1 = arith.constant 0 : index
    %3 = vector.load %arg2[%c0, %c0_1] : memref<64x32xbf16, #tpu.memory_space<vmem>>, vector<64x32xbf16>
    %c0_2 = arith.constant 0 : index
    %c0_3 = arith.constant 0 : index
    %4 = vector.load %arg3[%c0_2, %c0_3] : memref<32x24xbf16, #tpu.memory_space<vmem>>, vector<32x24xbf16>
    %cst = arith.constant dense<0.000000e+00> : vector<64x24xf32>
    %5 = tpu.matmul %3, %4, %cst {dimension_numbers = #tpu.dot_dimension_numbers<[1], [0], [0], [1], [0, 0, 1, 1], [], []>} : vector<64x32xbf16>, vector<32x24xbf16>, vector<64x24xf32> -> vector<64x24xf32>
    %c0_4 = arith.constant 0 : index
    %c0_5 = arith.constant 0 : index
    %6 = vector.load %arg4[%c0_4, %c0_5] : memref<1x24xf32, #tpu.memory_space<vmem>>, vector<1x24xf32>
    %7 = vector.broadcast %6 : vector<1x24xf32> to vector<64x24xf32>
    %8 = arith.addf %5, %7 : vector<64x24xf32>
    %9 = arith.negf %8 : vector<64x24xf32>
    %10 = math.exp %9 : vector<64x24xf32>
    %cst_6 = arith.constant 1.000000e+00 : f32
    %11 = vector.broadcast %cst_6 : f32 to vector<64x24xf32>
    %12 = arith.addf %11, %10 : vector<64x24xf32>
    %13 = arith.divf %11, %12 : vector<64x24xf32>
    %14 = arith.mulf %8, %13 : vector<64x24xf32>
    %15 = arith.truncf %14 : vector<64x24xf32> to vector<64x24xbf16>
    %c0_7 = arith.constant 0 : index
    %c0_8 = arith.constant 0 : index
    %16 = vector.load %arg5[%c0_7, %c0_8] : memref<24x1280xbf16, #tpu.memory_space<vmem>>, vector<24x1280xbf16>
    %cst_9 = arith.constant dense<0.000000e+00> : vector<64x1280xf32>
    %17 = tpu.matmul %15, %16, %cst_9 {dimension_numbers = #tpu.dot_dimension_numbers<[1], [0], [0], [1], [0, 0, 1, 1], [], []>} : vector<64x24xbf16>, vector<24x1280xbf16>, vector<64x1280xf32> -> vector<64x1280xf32>
    %c0_10 = arith.constant 0 : index
    %c0_11 = arith.constant 0 : index
    %18 = vector.load %arg6[%c0_10, %c0_11] : memref<1x1280xf32, #tpu.memory_space<vmem>>, vector<1x1280xf32>
    %19 = vector.broadcast %18 : vector<1x1280xf32> to vector<64x1280xf32>
    %20 = arith.addf %17, %19 : vector<64x1280xf32>
    %21 = arith.negf %20 : vector<64x1280xf32>
    %22 = math.exp %21 : vector<64x1280xf32>
    %cst_12 = arith.constant 1.000000e+00 : f32
    %23 = vector.broadcast %cst_12 : f32 to vector<64x1280xf32>
    %24 = arith.addf %23, %22 : vector<64x1280xf32>
    %25 = arith.divf %23, %24 : vector<64x1280xf32>
    %26 = arith.mulf %20, %25 : vector<64x1280xf32>
    %c0_13 = arith.constant 0 : index
    %c0_14 = arith.constant 0 : index
    %27 = vector.load %arg10[%c0_13, %c0_14] : memref<1x1280xf32, #tpu.memory_space<vmem>>, vector<1x1280xf32>
    %cst_15 = arith.constant dense<0.000000e+00> : vector<1280xf32>
    %28 = vector.multi_reduction <add>, %26, %cst_15 [0] : vector<64x1280xf32> to vector<1280xf32>
    %29 = vector.shape_cast %28 : vector<1280xf32> to vector<1x1280xf32>
    %30 = arith.addf %27, %29 : vector<1x1280xf32>
    %c0_16 = arith.constant 0 : index
    %c0_17 = arith.constant 0 : index
    %31 = vector.load %arg10[%c0_16, %c0_17] : memref<1x1280xf32, #tpu.memory_space<vmem>>, vector<1x1280xf32>
    tpu.vector_store %arg10[%c0_16, %c0_17], %30 {strides = array<i32>} : memref<1x1280xf32, #tpu.memory_space<vmem>>, vector<1x1280xf32>,
    %c0_i32_18 = arith.constant 0 : i32
    %32 = arith.cmpi eq, %arg1, %c0_i32_18 : i32
    %33 = arith.extui %32 : i1 to i32
    %c0_i32_19 = arith.constant 0 : i32
    %34 = arith.cmpi ne, %33, %c0_i32_19 : i32
    scf.if %34 {
      %c0_20 = arith.constant 0 : index
      %c0_21 = arith.constant 0 : index
      %35 = vector.load %arg10[%c0_20, %c0_21] : memref<1x1280xf32, #tpu.memory_space<vmem>>, vector<1x1280xf32>
      %cst_22 = arith.constant 1.562500e-02 : f32
      %36 = vector.broadcast %cst_22 : f32 to vector<1x1280xf32>
      %37 = arith.mulf %35, %36 : vector<1x1280xf32>
      %38 = arith.truncf %37 : vector<1x1280xf32> to vector<1x1280xbf16>
      %c0_23 = arith.constant 0 : index
      %c0_24 = arith.constant 0 : index
      %39 = vector.load %arg7[%c0_23, %c0_24] : memref<1280x128xbf16, #tpu.memory_space<vmem>>, vector<1280x128xbf16>
      %cst_25 = arith.constant dense<0.000000e+00> : vector<1x128xf32>
      %40 = tpu.matmul %38, %39, %cst_25 {dimension_numbers = #tpu.dot_dimension_numbers<[1], [0], [0], [1], [0, 0, 1, 1], [], []>} : vector<1x1280xbf16>, vector<1280x128xbf16>, vector<1x128xf32> -> vector<1x128xf32>
      %c0_26 = arith.constant 0 : index
      %c0_27 = arith.constant 0 : index
      %41 = vector.load %arg8[%c0_26, %c0_27] : memref<1x128xf32, #tpu.memory_space<vmem>>, vector<1x128xf32>
      %42 = arith.addf %40, %41 : vector<1x128xf32>
      %43 = vector.shape_cast %42 : vector<1x128xf32> to vector<1x1x128xf32>
      %c0_28 = arith.constant 0 : index
      %c0_29 = arith.constant 0 : index
      %c0_30 = arith.constant 0 : index
      %44 = vector.load %arg9[%c0_28, %c0_29, %c0_30] : memref<1x1x128xf32, #tpu.memory_space<vmem>>, vector<1x1x128xf32>
      tpu.vector_store %arg9[%c0_28, %c0_29, %c0_30], %43 {strides = array<i32>} : memref<1x1x128xf32, #tpu.memory_space<vmem>>, vector<1x1x128xf32>,
    } else {
    }
    return
  }
  func.func @transform_0(%arg0: i32, %arg1: i32) -> (i32, i32) {
    %c1_i32 = arith.constant 1 : i32
    %0 = arith.muli %arg0, %c1_i32 : i32
    %1 = arith.addi %0, %arg1 : i32
    %c0_i32 = arith.constant 0 : i32
    %c0_i32_0 = arith.constant 0 : i32
    return %1, %c0_i32 : i32, i32
  }
  func.func @transform_1(%arg0: i32, %arg1: i32) -> (i32, i32) {
    %c0_i32 = arith.constant 0 : i32
    %c0_i32_0 = arith.constant 0 : i32
    %c0_i32_1 = arith.constant 0 : i32
    return %c0_i32, %c0_i32_0 : i32, i32
  }
  func.func @transform_2(%arg0: i32, %arg1: i32) -> (i32, i32) {
    %c0_i32 = arith.constant 0 : i32
    %c0_i32_0 = arith.constant 0 : i32
    %c0_i32_1 = arith.constant 0 : i32
    return %c0_i32, %c0_i32_0 : i32, i32
  }
  func.func @transform_3(%arg0: i32, %arg1: i32) -> (i32, i32) {
    %c0_i32 = arith.constant 0 : i32
    %c0_i32_0 = arith.constant 0 : i32
    %c0_i32_1 = arith.constant 0 : i32
    return %c0_i32, %c0_i32_0 : i32, i32
  }
  func.func @transform_4(%arg0: i32, %arg1: i32) -> (i32, i32) {
    %c0_i32 = arith.constant 0 : i32
    %c0_i32_0 = arith.constant 0 : i32
    %c0_i32_1 = arith.constant 0 : i32
    return %c0_i32, %c0_i32_0 : i32, i32
  }
  func.func @transform_5(%arg0: i32, %arg1: i32) -> (i32, i32) {
    %c0_i32 = arith.constant 0 : i32
    %c0_i32_0 = arith.constant 0 : i32
    %c0_i32_1 = arith.constant 0 : i32
    return %c0_i32, %c0_i32_0 : i32, i32
  }
  func.func @transform_6(%arg0: i32, %arg1: i32) -> (i32, i32) {
    %c0_i32 = arith.constant 0 : i32
    %c0_i32_0 = arith.constant 0 : i32
    %c0_i32_1 = arith.constant 0 : i32
    return %c0_i32, %c0_i32_0 : i32, i32
  }
  func.func @transform_7(%arg0: i32, %arg1: i32) -> (i32, i32, i32) {
    %c0_i32 = arith.constant 0 : i32
    %c0_i32_0 = arith.constant 0 : i32
    %c0_i32_1 = arith.constant 0 : i32
    return %arg0, %c0_i32, %c0_i32_0 : i32, i32, i32
  }
}

</mosaic_0001>

<llo_original>
// kernel: base_model_forward.1
$region0: #{base_model_forward.1}
  #allocation0 [shape = 'u32[]', space=smem, size = 0x4, offset = 0x4, fixed_abs, tag = 'smem constant byte address 0x4 - core index']
  #allocation1 [shape = 'u32[144,128]{1,0:T(1,128)}', space=vmem, size = 0x12000, scoped, tag = 'internal scratch']
  #allocation2 [shape = 'f32[1,1280]{1,0:T(1,128)}', space=vmem, size = 0x1400, scoped, tag = 'scratch operand']
  %s0 = inlined_call_operand.vmem [shape: bf16[128,32], index: 0, kind: input, shape index: {}]
  %s1 = inlined_call_operand.vmem [shape: bf16[32,24], index: 1, kind: input, shape index: {}]
  %s2 = inlined_call_operand.vmem [shape: f32[1,24], index: 2, kind: input, shape index: {}]
  %s3 = inlined_call_operand.vmem [shape: bf16[24,1280], index: 3, kind: input, shape index: {}]
  %s4 = inlined_call_operand.vmem [shape: f32[1,1280], index: 4, kind: input, shape index: {}]
  %s5 = inlined_call_operand.vmem [shape: bf16[1280,128], index: 5, kind: input, shape index: {}]
  %s6 = inlined_call_operand.vmem [shape: f32[1,128], index: 6, kind: input, shape index: {}]
  %s7 = inlined_call_operand.hbm [shape: f32[2,1,128], index: 7, kind: output, shape index: {}]
  %s8 = sld [smem:[#allocation0]]
  $region69: #{base_model_forward.1} parent=0
    _
  %s10 = ssub.s32 1, %s8
  %s11 = scalar_select 0, %s10, %s8
  $region1: #{base_model_forward.1} parent=0
    #allocation3 [shape = 'u8[1024]{0}', space=vmem, size = 0x400, scoped, tag = 'output window, operand 0']
    #allocation4 [shape = 's32[2]{0}', space=sflag, size = 0x8, scoped, tag = 'scoped memory for base_model_forward.1']
    %12 = vsyncpa [#allocation4], 0
    %s13 = scalar_lea.sflag [#allocation4], 1
    %14 = vsyncpa %s13, 0
    loop: start=0, step=1, limit=4
    $region2: #{base_model_forward.1} parent=1 // loop_pre_header
      _
    $region3: #{base_model_forward.1} parent=1 // loop_header
      %s16 = sphi 0, %s20
      %p17 = scmp.ge.s32.totalorder %s16, 4
      %s23 = sphi 0, %s35
      %s24 = sphi 0, %s31
      %s25 = sphi 0, %s23
      %s26 = sphi 0, %s24
      %s27 = sphi 0, %s25
      %s28 = sphi 0, %s26
      %s40 = sphi 0, %s42
      %s43 = sphi 0, %s40
      %s44 = sphi 0, %s43
      %s60 = sphi 0, %s44
      %s64 = sphi 0, %s64
      %s66 = sphi 0, %s64
      %s67 = sphi 0, %s66
      %s81 = sphi 0, %s67
      %s85 = sphi 0, %s85
      %s87 = sphi 0, %s85
      %s88 = sphi 0, %s87
      %s102 = sphi 0, %s88
      %s106 = sphi 0, %s106
      %s108 = sphi 0, %s106
      %s109 = sphi 0, %s108
      %s123 = sphi 0, %s109
      %s127 = sphi 0, %s127
      %s129 = sphi 0, %s127
      %s130 = sphi 0, %s129
      %s144 = sphi 0, %s130
      %s148 = sphi 0, %s148
      %s150 = sphi 0, %s148
      %s151 = sphi 0, %s150
      %s165 = sphi 0, %s151
      %s169 = sphi 0, %s169
      %s171 = sphi 0, %s169
      %s172 = sphi 0, %s171
      %s186 = sphi 0, %s172
      %s192 = sphi 0, %s194
      %s195 = sphi 0, %s192
      %s196 = sphi 0, %s195
      %s212 = sphi 0, %s196
    $region4: #{base_model_forward.1} parent=1 // loop_header_branch
      %19 = sbr.rel (%p17) target = $region8
    $region5: #{base_model_forward.1} parent=1 // loop_body
      %s21 = ssub.s32 %s16, 1
      %s22 = ssub.s32 %s16, 2
      %s29 = sadd.s32 1, %s24
      %p30 = scmp.ge.s32.totalorder %s29, 1
      %s31 = scalar_select %p30, 0, %s29
      %s32 = sadd.s32 1, %s23
      %s33 = scalar_select %p30, %s32, %s23
      %p34 = scmp.ge.s32.totalorder %s33, 2
      %s35 = scalar_select %p34, 0, %s33
      %s36 = sadd.s32 %s23, %s24
      %s37 = sadd.s32 %s35, %s31
      %s38 = ssub.s32 %s36, %s37
      %p39 = scmp.eq.s32.totalorder %s38, 0
      %s41 = sadd.s32 %s40, 1
      %s42 = scalar_select %p39, %s40, %s41
      %p45 = pneg %p39
      %p46 = scmp.eq.s32.totalorder %s16, 1
      %p47 = por %p45, %p46
      %p48 = scmp.ne.s32.totalorder %s40, %s43
      %p49 = scmp.eq.s32.totalorder %s16, 0
      %p50 = por %p48, %p49
      %p51 = scmp.ne.s32.totalorder %s40, %s43
      %p52 = scmp.eq.s32.totalorder %s21, 1
      %p53 = por %p51, %p52
      %p54 = scmp.ne.s32.totalorder %s43, %s44
      %p55 = scmp.eq.s32.totalorder %s21, 0
      %p56 = por %p54, %p55
      %p57 = scmp.ne.s32.totalorder %s43, %s44
      %p58 = scmp.eq.s32.totalorder %s22, 1
      %p59 = por %p57, %p58
      %p61 = scmp.ne.s32.totalorder %s44, %s60
      %p62 = scmp.eq.s32.totalorder %s22, 0
      %p63 = por %p61, %p62
      %s65 = sadd.s32 %s64, 1
      %p68 = scmp.eq.s32.totalorder %s16, 1
      %p69 = scmp.ne.s32.totalorder %s64, %s66
      %p70 = scmp.eq.s32.totalorder %s16, 0
      %p71 = por %p69, %p70
      %p72 = scmp.ne.s32.totalorder %s64, %s66
      %p73 = scmp.eq.s32.totalorder %s21, 1
      %p74 = por %p72, %p73
      %p75 = scmp.ne.s32.totalorder %s66, %s67
      %p76 = scmp.eq.s32.totalorder %s21, 0
      %p77 = por %p75, %p76
      %p78 = scmp.ne.s32.totalorder %s66, %s67
      %p79 = scmp.eq.s32.totalorder %s22, 1
      %p80 = por %p78, %p79
      %p82 = scmp.ne.s32.totalorder %s67, %s81
      %p83 = scmp.eq.s32.totalorder %s22, 0
      %p84 = por %p82, %p83
      %s86 = sadd.s32 %s85, 1
      %p89 = scmp.eq.s32.totalorder %s16, 1
      %p90 = scmp.ne.s32.totalorder %s85, %s87
      %p91 = scmp.eq.s32.totalorder %s16, 0
      %p92 = por %p90, %p91
      %p93 = scmp.ne.s32.totalorder %s85, %s87
      %p94 = scmp.eq.s32.totalorder %s21, 1
      %p95 = por %p93, %p94
      %p96 = scmp.ne.s32.totalorder %s87, %s88
      %p97 = scmp.eq.s32.totalorder %s21, 0
      %p98 = por %p96, %p97
      %p99 = scmp.ne.s32.totalorder %s87, %s88
      %p100 = scmp.eq.s32.totalorder %s22, 1
      %p101 = por %p99, %p100
      %p103 = scmp.ne.s32.totalorder %s88, %s102
      %p104 = scmp.eq.s32.totalorder %s22, 0
      %p105 = por %p103, %p104
      %s107 = sadd.s32 %s106, 1
      %p110 = scmp.eq.s32.totalorder %s16, 1
      %p111 = scmp.ne.s32.totalorder %s106, %s108
      %p112 = scmp.eq.s32.totalorder %s16, 0
      %p113 = por %p111, %p112
      %p114 = scmp.ne.s32.totalorder %s106, %s108
      %p115 = scmp.eq.s32.totalorder %s21, 1
      %p116 = por %p114, %p115
      %p117 = scmp.ne.s32.totalorder %s108, %s109
      %p118 = scmp.eq.s32.totalorder %s21, 0
      %p119 = por %p117, %p118
      %p120 = scmp.ne.s32.totalorder %s108, %s109
      %p121 = scmp.eq.s32.totalorder %s22, 1
      %p122 = por %p120, %p121
      %p124 = scmp.ne.s32.totalorder %s109, %s123
      %p125 = scmp.eq.s32.totalorder %s22, 0
      %p126 = por %p124, %p125
      %s128 = sadd.s32 %s127, 1
      %p131 = scmp.eq.s32.totalorder %s16, 1
      %p132 = scmp.ne.s32.totalorder %s127, %s129
      %p133 = scmp.eq.s32.totalorder %s16, 0
      %p134 = por %p132, %p133
      %p135 = scmp.ne.s32.totalorder %s127, %s129
      %p136 = scmp.eq.s32.totalorder %s21, 1
      %p137 = por %p135, %p136
      %p138 = scmp.ne.s32.totalorder %s129, %s130
      %p139 = scmp.eq.s32.totalorder %s21, 0
      %p140 = por %p138, %p139
      %p141 = scmp.ne.s32.totalorder %s129, %s130
      %p142 = scmp.eq.s32.totalorder %s22, 1
      %p143 = por %p141, %p142
      %p145 = scmp.ne.s32.totalorder %s130, %s144
      %p146 = scmp.eq.s32.totalorder %s22, 0
      %p147 = por %p145, %p146
      %s149 = sadd.s32 %s148, 1
      %p152 = scmp.eq.s32.totalorder %s16, 1
      %p153 = scmp.ne.s32.totalorder %s148, %s150
      %p154 = scmp.eq.s32.totalorder %s16, 0
      %p155 = por %p153, %p154
      %p156 = scmp.ne.s32.totalorder %s148, %s150
      %p157 = scmp.eq.s32.totalorder %s21, 1
      %p158 = por %p156, %p157
      %p159 = scmp.ne.s32.totalorder %s150, %s151
      %p160 = scmp.eq.s32.totalorder %s21, 0
      %p161 = por %p159, %p160
      %p162 = scmp.ne.s32.totalorder %s150, %s151
      %p163 = scmp.eq.s32.totalorder %s22, 1
      %p164 = por %p162, %p163
      %p166 = scmp.ne.s32.totalorder %s151, %s165
      %p167 = scmp.eq.s32.totalorder %s22, 0
      %p168 = por %p166, %p167
      %s170 = sadd.s32 %s169, 1
      %p173 = scmp.eq.s32.totalorder %s16, 1
      %p174 = scmp.ne.s32.totalorder %s169, %s171
      %p175 = scmp.eq.s32.totalorder %s16, 0
      %p176 = por %p174, %p175
      %p177 = scmp.ne.s32.totalorder %s169, %s171
      %p178 = scmp.eq.s32.totalorder %s21, 1
      %p179 = por %p177, %p178
      %p180 = scmp.ne.s32.totalorder %s171, %s172
      %p181 = scmp.eq.s32.totalorder %s21, 0
      %p182 = por %p180, %p181
      %p183 = scmp.ne.s32.totalorder %s171, %s172
      %p184 = scmp.eq.s32.totalorder %s22, 1
      %p185 = por %p183, %p184
      %p187 = scmp.ne.s32.totalorder %s172, %s186
      %p188 = scmp.eq.s32.totalorder %s22, 0
      %p189 = por %p187, %p188
      %s190 = ssub.s32 %s23, %s35
      %p191 = scmp.eq.s32.totalorder %s190, 0
      %s193 = sadd.s32 %s192, 1
      %s194 = scalar_select %p191, %s192, %s193
      %p197 = pneg %p191
      %p198 = scmp.eq.s32.totalorder %s16, 1
      %p199 = por %p197, %p198
      %p200 = scmp.ne.s32.totalorder %s192, %s195
      %p201 = scmp.eq.s32.totalorder %s16, 0
      %p202 = por %p200, %p201
      %p203 = scmp.ne.s32.totalorder %s192, %s195
      %p204 = scmp.eq.s32.totalorder %s21, 1
      %p205 = por %p203, %p204
      %p206 = scmp.ne.s32.totalorder %s195, %s196
      %p207 = scmp.eq.s32.totalorder %s21, 0
      %p208 = por %p206, %p207
      %p209 = scmp.ne.s32.totalorder %s195, %s196
      %p210 = scmp.eq.s32.totalorder %s22, 1
      %p211 = por %p209, %p210
      %p213 = scmp.ne.s32.totalorder %s196, %s212
      %p214 = scmp.eq.s32.totalorder %s22, 0
      %p215 = por %p213, %p214
      %p216 = scmp.le.s32.totalorder 1, %s16
      %p217 = scmp.lt.s32.totalorder %s16, 3
      %p218 = pnand %p216, %p217
      %p219 = pneg %p218
      // Predicated region
      $region9: #{base_model_forward.1} parent=5 // pred_check
        _
      $region10: #{base_model_forward.1} parent=5 // pred_check_branch
        %221 = sbr.rel (%p218) target = $region12
      $region11: #{base_model_forward.1} parent=5 // pred_region
        %s222 = ssub.s32 %s16, 1
        // Predicated region
        $region13: #{base_model_forward.1} parent=11 // pred_check
          %p223 = pneg %p77
        $region14: #{base_model_forward.1} parent=11 // pred_check_branch
          %225 = sbr.rel (%p223) target = $region16
        $region15: #{base_model_forward.1} parent=11 // pred_region
          _
        $region16: #{base_model_forward.1} parent=11 // pred_fallthru
          _
        // Predicated region
        $region17: #{base_model_forward.1} parent=11 // pred_check
          %p226 = pneg %p98
        $region18: #{base_model_forward.1} parent=11 // pred_check_branch
          %228 = sbr.rel (%p226) target = $region20
        $region19: #{base_model_forward.1} parent=11 // pred_region
          _
        $region20: #{base_model_forward.1} parent=11 // pred_fallthru
          _
        // Predicated region
        $region21: #{base_model_forward.1} parent=11 // pred_check
          %p229 = pneg %p119
        $region22: #{base_model_forward.1} parent=11 // pred_check_branch
          %231 = sbr.rel (%p229) target = $region24
        $region23: #{base_model_forward.1} parent=11 // pred_region
          _
        $region24: #{base_model_forward.1} parent=11 // pred_fallthru
          _
        // Predicated region
        $region25: #{base_model_forward.1} parent=11 // pred_check
          %p232 = pneg %p140
        $region26: #{base_model_forward.1} parent=11 // pred_check_branch
          %234 = sbr.rel (%p232) target = $region28
        $region27: #{base_model_forward.1} parent=11 // pred_region
          _
        $region28: #{base_model_forward.1} parent=11 // pred_fallthru
          _
        // Predicated region
        $region29: #{base_model_forward.1} parent=11 // pred_check
          %p235 = pneg %p161
        $region30: #{base_model_forward.1} parent=11 // pred_check_branch
          %237 = sbr.rel (%p235) target = $region32
        $region31: #{base_model_forward.1} parent=11 // pred_region
          _
        $region32: #{base_model_forward.1} parent=11 // pred_fallthru
          _
        // Predicated region
        $region33: #{base_model_forward.1} parent=11 // pred_check
          %p238 = pneg %p182
        $region34: #{base_model_forward.1} parent=11 // pred_check_branch
          %240 = sbr.rel (%p238) target = $region36
        $region35: #{base_model_forward.1} parent=11 // pred_region
          _
        $region36: #{base_model_forward.1} parent=11 // pred_fallthru
          _
      $region12: #{base_model_forward.1} parent=5 // pred_fallthru
        _
      %p241 = scmp.lt.s32.totalorder %s16, 2
      // Predicated region
      $region37: #{base_model_forward.1} parent=5 // pred_check
        %p242 = pneg %p241
      $region38: #{base_model_forward.1} parent=5 // pred_check_branch
        %244 = sbr.rel (%p242) target = $region40
      $region39: #{base_model_forward.1} parent=5 // pred_region
        // Predicated region
        $region41: #{base_model_forward.1} parent=39 // pred_check
          %p245 = pneg %p50
        $region42: #{base_model_forward.1} parent=39 // pred_check_branch
          %247 = sbr.rel (%p245) target = $region44
        $region43: #{base_model_forward.1} parent=39 // pred_region
          %s248 = sadd.s32 %s23, %s24
          %s249 = smul.u32 8, %s248
          %p250 = scmp.lt.s32.totalorder %s249, 15
          %s251 = scalar_select %p250, %s249, 15
          %s252 = smul.addr %s251, 4
          %s253 = scalar_lea.vmem %s0, %s252
          %s254 = sadd.s32 %s23, %s24
          %s255 = smul.u32 8, %s254
        $region44: #{base_model_forward.1} parent=39 // pred_fallthru
          _
      $region40: #{base_model_forward.1} parent=5 // pred_fallthru
        _
      %p256 = scmp.le.s32.totalorder 1, %s16
      %p257 = scmp.lt.s32.totalorder %s16, 3
      %p258 = pnand %p256, %p257
      %p259 = pneg %p258
      // Predicated region
      $region45: #{base_model_forward.1} parent=5 // pred_check
        _
      $region46: #{base_model_forward.1} parent=5 // pred_check_branch
        %261 = sbr.rel (%p258) target = $region48
      $region47: #{base_model_forward.1} parent=5 // pred_region
        %s262 = ssub.s32 %s16, 1
        %s263 = sadd.s32 %s25, %s26
        %s264 = smul.u32 8, %s263
        %p265 = scmp.lt.s32.totalorder %s264, 15
        %s266 = scalar_select %p265, %s264, 15
        %s267 = smul.addr %s266, 4
        %s268 = scalar_lea.vmem %s0, %s267
        %p269 = pneg %p56
        %p270 = pneg %p53
        %p271 = pneg %p77
        %p272 = pneg %p74
        %p273 = pneg %p98
        %p274 = pneg %p95
        %p275 = pneg %p119
        %p276 = pneg %p116
        %p277 = pneg %p140
        %p278 = pneg %p137
        %p279 = pneg %p161
        %p280 = pneg %p158
        %p281 = pneg %p182
        %p282 = pneg %p179
        %p283 = pneg %p208
        %p284 = pneg %p205
        %s285 = sand.u32 %s195, 1
        %s286 = scalar_lea.sflag [#allocation4], %s285
        %s287 = sand.u32 %s195, 1
        %s288 = scalar_lea.vmem [#allocation3], %s287
        %s289 = sadd.s32 %s25, %s26
        %s290 = smul.u32 8, %s289
        %p291 = scmp.lt.s32.totalorder %s290, 15
        %s292 = scalar_select %p291, %s290, 15
        %s293 = smul.addr %s292, 4
        %s294 = scalar_lea.vmem %s0, %s293
        %s295 = sadd.s32 %s25, %s26
        %s296 = smul.u32 8, %s295
        %p298 = scmp.eq.s32.totalorder %s26, 0
        // Predicated region
        $region49: #{base_model_forward.1} parent=47 // pred_check
          %p299 = pneg %p298
        $region50: #{base_model_forward.1} parent=47 // pred_check_branch
          %301 = sbr.rel (%p299) target = $region52
        $region51: #{base_model_forward.1} parent=47 // pred_region
          %302 = vst [vmem:[#allocation2] sm:$0xff] 0.0
          %v303 = vlaneseq
          %vm304 = vcmp.ge.s32.totalorder %v303, 0
          %vm305 = vcmp.lt.s32.totalorder %v303, 256
          %vm306 = vmand %vm304, %vm305
          %307 = vst.msk [vmem:[#allocation2 + $0x8] sm:$0x3] %vm306, 0.0
        $region52: #{base_model_forward.1} parent=47 // pred_fallthru
          _
        %v308 = vld [vmem:[%s294] sm:$0xf]
        %v309 = vld [vmem:[%s294 + $0x4] sm:$0xf]
        %v310 = vld [vmem:[%s294 + $0x8] sm:$0xf]
        %v311 = vld [vmem:[%s294 + $0xc] sm:$0xf]
        %v312 = vld [vmem:[%s294 + $0x10] sm:$0xf]
        %v313 = vld [vmem:[%s294 + $0x14] sm:$0xf]
        %v314 = vld [vmem:[%s294 + $0x18] sm:$0xf]
        %v315 = vld [vmem:[%s294 + $0x1c] sm:$0xf]
        %v316 = vld [vmem:[%s1] sm:$0xf]
        %v317 = vld [vmem:[%s1 + $0x4] sm:$0xf]
        %v318 = vld [vmem:[%s1 + $0x8] sm:$0xf]
        %v319 = vld [vmem:[%s1 + $0xc] sm:$0xf]
        %v320 = vld [vmem:[%s2] sm:$0x1]
        %v322 = vlaneseq
        %v323 = vshrl.u32 %v322, 7
        %v324 = vsub.s32 0, %v323
        %v325 = vrot.slane %v320, %v324
        %v335 = vunpack.c.l.b16 %v308
        %v336 = vunpack.c.l.b16 %v309
        %v337 = vunpack.c.l.b16 %v310
        %v338 = vunpack.c.l.b16 %v311
        %v339 = vunpack.c.l.b16 %v312
        %v340 = vunpack.c.l.b16 %v313
        %v341 = vunpack.c.l.b16 %v314
        %v342 = vunpack.c.l.b16 %v315
        %v343 = vpack.c.b16 %v336, %v335
        %v344 = vpack.c.b16 %v338, %v337
        %v345 = vpack.c.b16 %v340, %v339
        %v346 = vpack.c.b16 %v342, %v341
        %v351 = vunpack.c.l.b16 %v316
        %v352 = vunpack.c.l.b16 %v317
        %v353 = vunpack.c.l.b16 %v318
        %v354 = vunpack.c.l.b16 %v319
        %v355 = vpack.c.b16 %v352, %v351
        %v356 = vpack.c.b16 %v354, %v353
        %vm359 = vcmask 261120
        %v361 = vsel %vm359, %v343, 0
        %v364 = vsel %vm359, %v344, 0
        %v367 = vsel %vm359, %v345, 0
        %v370 = vsel %vm359, %v346, 0
        %372 = vmatprep.subr.bf16.mxu0 0
        %373 = vmatpush1.bf16.msra.mxu0 %v355
        %374 = vmatprep.subr.bf16.mxu0 0
        %375 = vmatpush1.bf16.msra.mxu0 %v356
        %376 = vmatprep.subr.bf16.mxu0 0
        %377 = vmatpush1.bf16.msra.mxu0 0
        %378 = vmatprep.subr.bf16.mxu0 0
        %379 = vmatpush1.bf16.msra.mxu0 0
        %380 = vmatprep.subr.bf16.mxu0 0
        %381 = vmatpush1.bf16.msra.mxu0 0
        %382 = vmatprep.subr.bf16.mxu0 0
        %383 = vmatpush1.bf16.msra.mxu0 0
        %384 = vmatprep.subr.bf16.mxu0 0
        %385 = vmatpush1.bf16.msra.mxu0 0
        %386 = vmatprep.subr.bf16.mxu0 0
        %387 = vmatpush1.bf16.msra.mxu0 0
        %388 = vmatprep.subr.bf16.mxu0 0
        %389 = vmatpush1.bf16.msra.mxu0 0
        %390 = vmatprep.subr.bf16.mxu0 0
        %391 = vmatpush1.bf16.msra.mxu0 0
        %392 = vmatprep.subr.bf16.mxu0 0
        %393 = vmatpush1.bf16.msra.mxu0 0
        %394 = vmatprep.subr.bf16.mxu0 0
        %395 = vmatpush1.bf16.msra.mxu0 0
        %396 = vmatprep.subr.bf16.mxu0 0
        %397 = vmatpush1.bf16.msra.mxu0 0
        %398 = vmatprep.subr.bf16.mxu0 0
        %399 = vmatpush1.bf16.msra.mxu0 0
        %400 = vmatprep.subr.bf16.mxu0 0
        %401 = vmatpush1.bf16.msra.mxu0 0
        %402 = vmatprep.subr.bf16.mxu0 0
        %403 = vmatpush1.bf16.msra.mxu0 0
        %404 = vmatprep.mubr.bf16.mxu0 0
        %405 = vmatmul.mubr.bf16.gmra.mrb[0].mxu0 %v361
        %v406 = vpop.f32.mrb[0].mxu0
        %v407 = vadd.f32 %v325, %v406
        %v408 = vpop.f32.mrb[0].mxu0
        %v409 = vpop.f32.mrb[0].mxu0
        %v410 = vadd.f32 %v325, %v409
        %v411 = vpop.f32.mrb[0].mxu0
        %412 = vmatprep.mubr.bf16.mxu0 0
        %413 = vmatmul.mubr.bf16.gmra.mrb[0].mxu0 %v364
        %v414 = vpop.f32.mrb[0].mxu0
        %v415 = vadd.f32 %v325, %v414
        %v416 = vpop.f32.mrb[0].mxu0
        %v417 = vpop.f32.mrb[0].mxu0
        %v418 = vadd.f32 %v325, %v417
        %v419 = vpop.f32.mrb[0].mxu0
        %420 = vmatprep.mubr.bf16.mxu0 0
        %421 = vmatmul.mubr.bf16.gmra.mrb[0].mxu0 %v367
        %v422 = vpop.f32.mrb[0].mxu0
        %v423 = vadd.f32 %v325, %v422
        %v424 = vpop.f32.mrb[0].mxu0
        %v425 = vpop.f32.mrb[0].mxu0
        %v426 = vadd.f32 %v325, %v425
        %v427 = vpop.f32.mrb[0].mxu0
        %428 = vmatprep.mubr.bf16.mxu0 0
        %429 = vmatmul.mubr.bf16.gmra.mrb[0].mxu0 %v370
        %v430 = vpop.f32.mrb[0].mxu0
        %v431 = vadd.f32 %v325, %v430
        %v432 = vpop.f32.mrb[0].mxu0
        %v433 = vpop.f32.mrb[0].mxu0
        %v434 = vadd.f32 %v325, %v433
        %v435 = vpop.f32.mrb[0].mxu0
        %436 = vdwg.mxu0
        %v437 = vxor.u32 %v407, 2147483648
        %v438 = vxor.u32 %v410, 2147483648
        %v439 = vxor.u32 %v415, 2147483648
        %v440 = vxor.u32 %v418, 2147483648
        %v441 = vxor.u32 %v423, 2147483648
        %v442 = vxor.u32 %v426, 2147483648
        %v443 = vxor.u32 %v431, 2147483648
        %v444 = vxor.u32 %v434, 2147483648
        %v445 = vmul.f32 %v437, 1.442695
        %v446 = vpow.pop %v445
        %v447 = vmul.f32 %v438, 1.442695
        %v448 = vpow.pop %v447
        %v449 = vmul.f32 %v439, 1.442695
        %v450 = vpow.pop %v449
        %v451 = vmul.f32 %v440, 1.442695
        %v452 = vpow.pop %v451
        %v453 = vmul.f32 %v441, 1.442695
        %v454 = vpow.pop %v453
        %v455 = vmul.f32 %v442, 1.442695
        %v456 = vpow.pop %v455
        %v457 = vmul.f32 %v443, 1.442695
        %v458 = vpow.pop %v457
        %v459 = vmul.f32 %v444, 1.442695
        %v460 = vpow.pop %v459
        %v461 = vadd.f32 %v446, 1.0
        %v462 = vadd.f32 %v448, 1.0
        %v463 = vadd.f32 %v450, 1.0
        %v464 = vadd.f32 %v452, 1.0
        %v465 = vadd.f32 %v454, 1.0
        %v466 = vadd.f32 %v456, 1.0
        %v467 = vadd.f32 %v458, 1.0
        %v468 = vadd.f32 %v460, 1.0
        %v469 = vrcp.pop %v461
        %v470 = vmul.f32 1.0, %v469
        %v471 = vrcp.pop %v462
        %v472 = vmul.f32 1.0, %v471
        %v473 = vrcp.pop %v463
        %v474 = vmul.f32 1.0, %v473
        %v475 = vrcp.pop %v464
        %v476 = vmul.f32 1.0, %v475
        %v477 = vrcp.pop %v465
        %v478 = vmul.f32 1.0, %v477
        %v479 = vrcp.pop %v466
        %v480 = vmul.f32 1.0, %v479
        %v481 = vrcp.pop %v467
        %v482 = vmul.f32 1.0, %v481
        %v483 = vrcp.pop %v468
        %v484 = vmul.f32 1.0, %v483
        %v485 = vmul.f32 %v407, %v470
        %v486 = vmul.f32 %v410, %v472
        %v487 = vmul.f32 %v415, %v474
        %v488 = vmul.f32 %v418, %v476
        %v489 = vmul.f32 %v423, %v478
        %v490 = vmul.f32 %v426, %v480
        %v491 = vmul.f32 %v431, %v482
        %v492 = vmul.f32 %v434, %v484
        %v493 = vpack.c.bf16 %v486, %v485
        %v494 = vpack.c.bf16 %v488, %v487
        %v495 = vpack.c.bf16 %v490, %v489
        %v496 = vpack.c.bf16 %v492, %v491
        %v497 = vld [vmem:[%s3] sm:$0xff]
        %v498 = vld [vmem:[%s3 + $0x8] sm:$0xff]
        %v499 = vld [vmem:[%s3 + $0x10] sm:$0xff]
        %v500 = vld [vmem:[%s3 + $0x18] sm:$0xff]
        %v501 = vld [vmem:[%s3 + $0x20] sm:$0xff]
        %v502 = vld [vmem:[%s3 + $0x28] sm:$0xff]
        %v503 = vld [vmem:[%s3 + $0x30] sm:$0xff]
        %v504 = vld [vmem:[%s3 + $0x38] sm:$0xff]
        %v505 = vld [vmem:[%s3 + $0x40] sm:$0xff]
        %v506 = vld [vmem:[%s3 + $0x48] sm:$0xff]
        %v507 = vld [vmem:[%s3 + $0x50] sm:$0xff]
        %v508 = vld [vmem:[%s3 + $0x58] sm:$0xff]
        %v509 = vld [vmem:[%s3 + $0x60] sm:$0xff]
        %v510 = vld [vmem:[%s3 + $0x68] sm:$0xff]
        %v511 = vld [vmem:[%s3 + $0x70] sm:$0xff]
        %v512 = vld [vmem:[%s4] sm:$0xff]
        %v513 = vld [vmem:[%s4 + $0x8] sm:$0x3]
        %v516 = vlaneseq
        %v517 = vshrl.u32 %v516, 7
        %v518 = vsub.s32 0, %v517
        %v519 = vrot.slane %v512, %v518
        %v520 = vlaneseq
        %v521 = vshrl.u32 %v520, 7
        %v522 = vsub.s32 1, %v521
        %v523 = vrot.slane %v512, %v522
        %v524 = vlaneseq
        %v525 = vshrl.u32 %v524, 7
        %v526 = vsub.s32 2, %v525
        %v527 = vrot.slane %v512, %v526
        %v528 = vlaneseq
        %v529 = vshrl.u32 %v528, 7
        %v530 = vsub.s32 3, %v529
        %v531 = vrot.slane %v512, %v530
        %v532 = vlaneseq
        %v533 = vshrl.u32 %v532, 7
        %v534 = vsub.s32 4, %v533
        %v535 = vrot.slane %v512, %v534
        %v536 = vlaneseq
        %v537 = vshrl.u32 %v536, 7
        %v538 = vsub.s32 5, %v537
        %v539 = vrot.slane %v512, %v538
        %v540 = vlaneseq
        %v541 = vshrl.u32 %v540, 7
        %v542 = vsub.s32 6, %v541
        %v543 = vrot.slane %v512, %v542
        %v544 = vlaneseq
        %v545 = vshrl.u32 %v544, 7
        %v546 = vsub.s32 7, %v545
        %v547 = vrot.slane %v512, %v546
        %v548 = vlaneseq
        %v549 = vshrl.u32 %v548, 7
        %v550 = vsub.s32 0, %v549
        %v551 = vrot.slane %v513, %v550
        %v552 = vlaneseq
        %v553 = vshrl.u32 %v552, 7
        %v554 = vsub.s32 1, %v553
        %v555 = vrot.slane %v513, %v554
        %v581 = vunpack.c.l.b16 %v497
        %v582 = vunpack.c.h.b16 %v497
        %v583 = vunpack.c.l.b16 %v498
        %v584 = vunpack.c.h.b16 %v498
        %v585 = vunpack.c.l.b16 %v499
        %v586 = vunpack.c.h.b16 %v499
        %v587 = vunpack.c.l.b16 %v500
        %v588 = vunpack.c.h.b16 %v500
        %v589 = vunpack.c.l.b16 %v501
        %v590 = vunpack.c.h.b16 %v501
        %v591 = vunpack.c.l.b16 %v502
        %v592 = vunpack.c.h.b16 %v502
        %v593 = vunpack.c.l.b16 %v503
        %v594 = vunpack.c.h.b16 %v503
        %v595 = vunpack.c.l.b16 %v504
        %v596 = vunpack.c.h.b16 %v504
        %v597 = vunpack.c.l.b16 %v505
        %v598 = vunpack.c.h.b16 %v505
        %v599 = vunpack.c.l.b16 %v506
        %v600 = vunpack.c.h.b16 %v506
        %v601 = vunpack.c.l.b16 %v507
        %v602 = vunpack.c.h.b16 %v507
        %v603 = vunpack.c.l.b16 %v508
        %v604 = vunpack.c.h.b16 %v508
        %v605 = vunpack.c.l.b16 %v509
        %v606 = vunpack.c.h.b16 %v509
        %v607 = vunpack.c.l.b16 %v510
        %v608 = vunpack.c.h.b16 %v510
        %v609 = vunpack.c.l.b16 %v511
        %v610 = vunpack.c.h.b16 %v511
        %v611 = vpack.c.b16 %v591, %v581
        %v612 = vpack.c.b16 %v592, %v582
        %v613 = vpack.c.b16 %v593, %v583
        %v614 = vpack.c.b16 %v594, %v584
        %v615 = vpack.c.b16 %v595, %v585
        %v616 = vpack.c.b16 %v596, %v586
        %v617 = vpack.c.b16 %v597, %v587
        %v618 = vpack.c.b16 %v598, %v588
        %v619 = vpack.c.b16 %v599, %v589
        %v620 = vpack.c.b16 %v600, %v590
        %v621 = vpack.c.b16 %v601, %v601
        %v622 = vpack.c.b16 %v602, %v602
        %v623 = vpack.c.b16 %v603, %v603
        %v624 = vpack.c.b16 %v604, %v604
        %v625 = vpack.c.b16 %v605, %v605
        %v626 = vpack.c.b16 %v606, %v606
        %v627 = vpack.c.b16 %v607, %v607
        %v628 = vpack.c.b16 %v608, %v608
        %v629 = vpack.c.b16 %v609, %v609
        %v630 = vpack.c.b16 %v610, %v610
        %vm641 = vcmask 195584
        %v643 = vsel %vm641, %v493, 0
        %v646 = vsel %vm641, %v494, 0
        %v649 = vsel %vm641, %v495, 0
        %v652 = vsel %vm641, %v496, 0
        %vm654 = vcmask 1043456
        %v656 = vsel %vm654, %v621, 0
        %v659 = vsel %vm654, %v622, 0
        %v662 = vsel %vm654, %v623, 0
        %v665 = vsel %vm654, %v624, 0
        %v668 = vsel %vm654, %v625, 0
        %v671 = vsel %vm654, %v626, 0
        %v674 = vsel %vm654, %v627, 0
        %v677 = vsel %vm654, %v628, 0
        %v680 = vsel %vm654, %v629, 0
        %v683 = vsel %vm654, %v630, 0
        %685 = vmatprep.subr.bf16.mxu0 %v612
        %686 = vmatpush1.bf16.msra.mxu0 %v611
        %687 = vmatprep.subr.bf16.mxu0 %v659
        %688 = vmatpush1.bf16.msra.mxu0 %v656
        %689 = vmatprep.subr.bf16.mxu0 0
        %690 = vmatpush1.bf16.msra.mxu0 0
        %691 = vmatprep.subr.bf16.mxu0 0
        %692 = vmatpush1.bf16.msra.mxu0 0
        %693 = vmatprep.subr.bf16.mxu0 0
        %694 = vmatpush1.bf16.msra.mxu0 0
        %695 = vmatprep.subr.bf16.mxu0 0
        %696 = vmatpush1.bf16.msra.mxu0 0
        %697 = vmatprep.subr.bf16.mxu0 0
        %698 = vmatpush1.bf16.msra.mxu0 0
        %699 = vmatprep.subr.bf16.mxu0 0
        %700 = vmatpush1.bf16.msra.mxu0 0
        %701 = vmatprep.subr.bf16.mxu0 0
        %702 = vmatpush1.bf16.msra.mxu0 0
        %703 = vmatprep.subr.bf16.mxu0 0
        %704 = vmatpush1.bf16.msra.mxu0 0
        %705 = vmatprep.subr.bf16.mxu0 0
        %706 = vmatpush1.bf16.msra.mxu0 0
        %707 = vmatprep.subr.bf16.mxu0 0
        %708 = vmatpush1.bf16.msra.mxu0 0
        %709 = vmatprep.subr.bf16.mxu0 0
        %710 = vmatpush1.bf16.msra.mxu0 0
        %711 = vmatprep.subr.bf16.mxu0 0
        %712 = vmatpush1.bf16.msra.mxu0 0
        %713 = vmatprep.subr.bf16.mxu0 0
        %714 = vmatpush1.bf16.msra.mxu0 0
        %715 = vmatprep.subr.bf16.mxu0 0
        %716 = vmatpush1.bf16.msra.mxu0 0
        %717 = vmatprep.mubr.bf16.mxu0 0
        %718 = vmatmul.mubr.bf16.gmra.mrb[0].mxu0 %v643
        %v719 = vpop.f32.mrb[0].mxu0
        %v720 = vadd.f32 %v519, %v719
        %v721 = vpop.f32.mrb[0].mxu0
        %v722 = vadd.f32 %v523, %v721
        %v723 = vpop.f32.mrb[0].mxu0
        %v724 = vadd.f32 %v519, %v723
        %v725 = vpop.f32.mrb[0].mxu0
        %v726 = vadd.f32 %v523, %v725
        %727 = vmatprep.mubr.bf16.mxu0 0
        %728 = vmatmul.mubr.bf16.gmra.mrb[0].mxu0 %v646
        %v729 = vpop.f32.mrb[0].mxu0
        %v730 = vadd.f32 %v519, %v729
        %v731 = vpop.f32.mrb[0].mxu0
        %v732 = vadd.f32 %v523, %v731
        %v733 = vpop.f32.mrb[0].mxu0
        %v734 = vadd.f32 %v519, %v733
        %v735 = vpop.f32.mrb[0].mxu0
        %v736 = vadd.f32 %v523, %v735
        %737 = vmatprep.mubr.bf16.mxu0 0
        %738 = vmatmul.mubr.bf16.gmra.mrb[0].mxu0 %v649
        %v739 = vpop.f32.mrb[0].mxu0
        %v740 = vadd.f32 %v519, %v739
        %v741 = vpop.f32.mrb[0].mxu0
        %v742 = vadd.f32 %v523, %v741
        %v743 = vpop.f32.mrb[0].mxu0
        %v744 = vadd.f32 %v519, %v743
        %v745 = vpop.f32.mrb[0].mxu0
        %v746 = vadd.f32 %v523, %v745
        %747 = vmatprep.mubr.bf16.mxu0 0
        %748 = vmatmul.mubr.bf16.gmra.mrb[0].mxu0 %v652
        %v749 = vpop.f32.mrb[0].mxu0
        %v750 = vadd.f32 %v519, %v749
        %v751 = vpop.f32.mrb[0].mxu0
        %v752 = vadd.f32 %v523, %v751
        %v753 = vpop.f32.mrb[0].mxu0
        %v754 = vadd.f32 %v519, %v753
        %v755 = vpop.f32.mrb[0].mxu0
        %v756 = vadd.f32 %v523, %v755
        %757 = vdwg.mxu0
        %758 = vmatprep.subr.bf16.mxu0 %v614
        %759 = vmatpush1.bf16.msra.mxu0 %v613
        %760 = vmatprep.subr.bf16.mxu0 %v665
        %761 = vmatpush1.bf16.msra.mxu0 %v662
        %762 = vmatprep.subr.bf16.mxu0 0
        %763 = vmatpush1.bf16.msra.mxu0 0
        %764 = vmatprep.subr.bf16.mxu0 0
        %765 = vmatpush1.bf16.msra.mxu0 0
        %766 = vmatprep.subr.bf16.mxu0 0
        %767 = vmatpush1.bf16.msra.mxu0 0
        %768 = vmatprep.subr.bf16.mxu0 0
        %769 = vmatpush1.bf16.msra.mxu0 0
        %770 = vmatprep.subr.bf16.mxu0 0
        %771 = vmatpush1.bf16.msra.mxu0 0
        %772 = vmatprep.subr.bf16.mxu0 0
        %773 = vmatpush1.bf16.msra.mxu0 0
        %774 = vmatprep.subr.bf16.mxu0 0
        %775 = vmatpush1.bf16.msra.mxu0 0
        %776 = vmatprep.subr.bf16.mxu0 0
        %777 = vmatpush1.bf16.msra.mxu0 0
        %778 = vmatprep.subr.bf16.mxu0 0
        %779 = vmatpush1.bf16.msra.mxu0 0
        %780 = vmatprep.subr.bf16.mxu0 0
        %781 = vmatpush1.bf16.msra.mxu0 0
        %782 = vmatprep.subr.bf16.mxu0 0
        %783 = vmatpush1.bf16.msra.mxu0 0
        %784 = vmatprep.subr.bf16.mxu0 0
        %785 = vmatpush1.bf16.msra.mxu0 0
        %786 = vmatprep.subr.bf16.mxu0 0
        %787 = vmatpush1.bf16.msra.mxu0 0
        %788 = vmatprep.subr.bf16.mxu0 0
        %789 = vmatpush1.bf16.msra.mxu0 0
        %790 = vmatprep.mubr.bf16.mxu0 0
        %791 = vmatmul.mubr.bf16.gmra.mrb[0].mxu0 %v643
        %v792 = vpop.f32.mrb[0].mxu0
        %v793 = vadd.f32 %v527, %v792
        %v794 = vpop.f32.mrb[0].mxu0
        %v795 = vadd.f32 %v531, %v794
        %v796 = vpop.f32.mrb[0].mxu0
        %v797 = vadd.f32 %v527, %v796
        %v798 = vpop.f32.mrb[0].mxu0
        %v799 = vadd.f32 %v531, %v798
        %800 = vmatprep.mubr.bf16.mxu0 0
        %801 = vmatmul.mubr.bf16.gmra.mrb[0].mxu0 %v646
        %v802 = vpop.f32.mrb[0].mxu0
        %v803 = vadd.f32 %v527, %v802
        %v804 = vpop.f32.mrb[0].mxu0
        %v805 = vadd.f32 %v531, %v804
        %v806 = vpop.f32.mrb[0].mxu0
        %v807 = vadd.f32 %v527, %v806
        %v808 = vpop.f32.mrb[0].mxu0
        %v809 = vadd.f32 %v531, %v808
        %810 = vmatprep.mubr.bf16.mxu0 0
        %811 = vmatmul.mubr.bf16.gmra.mrb[0].mxu0 %v649
        %v812 = vpop.f32.mrb[0].mxu0
        %v813 = vadd.f32 %v527, %v812
        %v814 = vpop.f32.mrb[0].mxu0
        %v815 = vadd.f32 %v531, %v814
        %v816 = vpop.f32.mrb[0].mxu0
        %v817 = vadd.f32 %v527, %v816
        %v818 = vpop.f32.mrb[0].mxu0
        %v819 = vadd.f32 %v531, %v818
        %820 = vmatprep.mubr.bf16.mxu0 0
        %821 = vmatmul.mubr.bf16.gmra.mrb[0].mxu0 %v652
        %v822 = vpop.f32.mrb[0].mxu0
        %v823 = vadd.f32 %v527, %v822
        %v824 = vpop.f32.mrb[0].mxu0
        %v825 = vadd.f32 %v531, %v824
        %v826 = vpop.f32.mrb[0].mxu0
        %v827 = vadd.f32 %v527, %v826
        %v828 = vpop.f32.mrb[0].mxu0
        %v829 = vadd.f32 %v531, %v828
        %830 = vdwg.mxu0
        %831 = vmatprep.subr.bf16.mxu0 %v616
        %832 = vmatpush1.bf16.msra.mxu0 %v615
        %833 = vmatprep.subr.bf16.mxu0 %v671
        %834 = vmatpush1.bf16.msra.mxu0 %v668
        %835 = vmatprep.subr.bf16.mxu0 0
        %836 = vmatpush1.bf16.msra.mxu0 0
        %837 = vmatprep.subr.bf16.mxu0 0
        %838 = vmatpush1.bf16.msra.mxu0 0
        %839 = vmatprep.subr.bf16.mxu0 0
        %840 = vmatpush1.bf16.msra.mxu0 0
        %841 = vmatprep.subr.bf16.mxu0 0
        %842 = vmatpush1.bf16.msra.mxu0 0
        %843 = vmatprep.subr.bf16.mxu0 0
        %844 = vmatpush1.bf16.msra.mxu0 0
        %845 = vmatprep.subr.bf16.mxu0 0
        %846 = vmatpush1.bf16.msra.mxu0 0
        %847 = vmatprep.subr.bf16.mxu0 0
        %848 = vmatpush1.bf16.msra.mxu0 0
        %849 = vmatprep.subr.bf16.mxu0 0
        %850 = vmatpush1.bf16.msra.mxu0 0
        %851 = vmatprep.subr.bf16.mxu0 0
        %852 = vmatpush1.bf16.msra.mxu0 0
        %853 = vmatprep.subr.bf16.mxu0 0
        %854 = vmatpush1.bf16.msra.mxu0 0
        %855 = vmatprep.subr.bf16.mxu0 0
        %856 = vmatpush1.bf16.msra.mxu0 0
        %857 = vmatprep.subr.bf16.mxu0 0
        %858 = vmatpush1.bf16.msra.mxu0 0
        %859 = vmatprep.subr.bf16.mxu0 0
        %860 = vmatpush1.bf16.msra.mxu0 0
        %861 = vmatprep.subr.bf16.mxu0 0
        %862 = vmatpush1.bf16.msra.mxu0 0
        %863 = vmatprep.mubr.bf16.mxu0 0
        %864 = vmatmul.mubr.bf16.gmra.mrb[0].mxu0 %v643
        %v865 = vpop.f32.mrb[0].mxu0
        %v866 = vadd.f32 %v535, %v865
        %v867 = vpop.f32.mrb[0].mxu0
        %v868 = vadd.f32 %v539, %v867
        %v869 = vpop.f32.mrb[0].mxu0
        %v870 = vadd.f32 %v535, %v869
        %v871 = vpop.f32.mrb[0].mxu0
        %v872 = vadd.f32 %v539, %v871
        %873 = vmatprep.mubr.bf16.mxu0 0
        %874 = vmatmul.mubr.bf16.gmra.mrb[0].mxu0 %v646
        %v875 = vpop.f32.mrb[0].mxu0
        %v876 = vadd.f32 %v535, %v875
        %v877 = vpop.f32.mrb[0].mxu0
        %v878 = vadd.f32 %v539, %v877
        %v879 = vpop.f32.mrb[0].mxu0
        %v880 = vadd.f32 %v535, %v879
        %v881 = vpop.f32.mrb[0].mxu0
        %v882 = vadd.f32 %v539, %v881
        %883 = vmatprep.mubr.bf16.mxu0 0
        %884 = vmatmul.mubr.bf16.gmra.mrb[0].mxu0 %v649
        %v885 = vpop.f32.mrb[0].mxu0
        %v886 = vadd.f32 %v535, %v885
        %v887 = vpop.f32.mrb[0].mxu0
        %v888 = vadd.f32 %v539, %v887
        %v889 = vpop.f32.mrb[0].mxu0
        %v890 = vadd.f32 %v535, %v889
        %v891 = vpop.f32.mrb[0].mxu0
        %v892 = vadd.f32 %v539, %v891
        %893 = vmatprep.mubr.bf16.mxu0 0
        %894 = vmatmul.mubr.bf16.gmra.mrb[0].mxu0 %v652
        %v895 = vpop.f32.mrb[0].mxu0
        %v896 = vadd.f32 %v535, %v895
        %v897 = vpop.f32.mrb[0].mxu0
        %v898 = vadd.f32 %v539, %v897
        %v899 = vpop.f32.mrb[0].mxu0
        %v900 = vadd.f32 %v535, %v899
        %v901 = vpop.f32.mrb[0].mxu0
        %v902 = vadd.f32 %v539, %v901
        %903 = vdwg.mxu0
        %904 = vmatprep.subr.bf16.mxu0 %v618
        %905 = vmatpush1.bf16.msra.mxu0 %v617
        %906 = vmatprep.subr.bf16.mxu0 %v677
        %907 = vmatpush1.bf16.msra.mxu0 %v674
        %908 = vmatprep.subr.bf16.mxu0 0
        %909 = vmatpush1.bf16.msra.mxu0 0
        %910 = vmatprep.subr.bf16.mxu0 0
        %911 = vmatpush1.bf16.msra.mxu0 0
        %912 = vmatprep.subr.bf16.mxu0 0
        %913 = vmatpush1.bf16.msra.mxu0 0
        %914 = vmatprep.subr.bf16.mxu0 0
        %915 = vmatpush1.bf16.msra.mxu0 0
        %916 = vmatprep.subr.bf16.mxu0 0
        %917 = vmatpush1.bf16.msra.mxu0 0
        %918 = vmatprep.subr.bf16.mxu0 0
        %919 = vmatpush1.bf16.msra.mxu0 0
        %920 = vmatprep.subr.bf16.mxu0 0
        %921 = vmatpush1.bf16.msra.mxu0 0
        %922 = vmatprep.subr.bf16.mxu0 0
        %923 = vmatpush1.bf16.msra.mxu0 0
        %924 = vmatprep.subr.bf16.mxu0 0
        %925 = vmatpush1.bf16.msra.mxu0 0
        %926 = vmatprep.subr.bf16.mxu0 0
        %927 = vmatpush1.bf16.msra.mxu0 0
        %928 = vmatprep.subr.bf16.mxu0 0
        %929 = vmatpush1.bf16.msra.mxu0 0
        %930 = vmatprep.subr.bf16.mxu0 0
        %931 = vmatpush1.bf16.msra.mxu0 0
        %932 = vmatprep.subr.bf16.mxu0 0
        %933 = vmatpush1.bf16.msra.mxu0 0
        %934 = vmatprep.subr.bf16.mxu0 0
        %935 = vmatpush1.bf16.msra.mxu0 0
        %936 = vmatprep.mubr.bf16.mxu0 0
        %937 = vmatmul.mubr.bf16.gmra.mrb[0].mxu0 %v643
        %v938 = vpop.f32.mrb[0].mxu0
        %v939 = vadd.f32 %v543, %v938
        %v940 = vpop.f32.mrb[0].mxu0
        %v941 = vadd.f32 %v547, %v940
        %v942 = vpop.f32.mrb[0].mxu0
        %v943 = vadd.f32 %v543, %v942
        %v944 = vpop.f32.mrb[0].mxu0
        %v945 = vadd.f32 %v547, %v944
        %946 = vmatprep.mubr.bf16.mxu0 0
        %947 = vmatmul.mubr.bf16.gmra.mrb[0].mxu0 %v646
        %v948 = vpop.f32.mrb[0].mxu0
        %v949 = vadd.f32 %v543, %v948
        %v950 = vpop.f32.mrb[0].mxu0
        %v951 = vadd.f32 %v547, %v950
        %v952 = vpop.f32.mrb[0].mxu0
        %v953 = vadd.f32 %v543, %v952
        %v954 = vpop.f32.mrb[0].mxu0
        %v955 = vadd.f32 %v547, %v954
        %956 = vmatprep.mubr.bf16.mxu0 0
        %957 = vmatmul.mubr.bf16.gmra.mrb[0].mxu0 %v649
        %v958 = vpop.f32.mrb[0].mxu0
        %v959 = vadd.f32 %v543, %v958
        %v960 = vpop.f32.mrb[0].mxu0
        %v961 = vadd.f32 %v547, %v960
        %v962 = vpop.f32.mrb[0].mxu0
        %v963 = vadd.f32 %v543, %v962
        %v964 = vpop.f32.mrb[0].mxu0
        %v965 = vadd.f32 %v547, %v964
        %966 = vmatprep.mubr.bf16.mxu0 0
        %967 = vmatmul.mubr.bf16.gmra.mrb[0].mxu0 %v652
        %v968 = vpop.f32.mrb[0].mxu0
        %v969 = vadd.f32 %v543, %v968
        %v970 = vpop.f32.mrb[0].mxu0
        %v971 = vadd.f32 %v547, %v970
        %v972 = vpop.f32.mrb[0].mxu0
        %v973 = vadd.f32 %v543, %v972
        %v974 = vpop.f32.mrb[0].mxu0
        %v975 = vadd.f32 %v547, %v974
        %976 = vdwg.mxu0
        %977 = vmatprep.subr.bf16.mxu0 %v620
        %978 = vmatpush1.bf16.msra.mxu0 %v619
        %979 = vmatprep.subr.bf16.mxu0 %v683
        %980 = vmatpush1.bf16.msra.mxu0 %v680
        %981 = vmatprep.subr.bf16.mxu0 0
        %982 = vmatpush1.bf16.msra.mxu0 0
        %983 = vmatprep.subr.bf16.mxu0 0
        %984 = vmatpush1.bf16.msra.mxu0 0
        %985 = vmatprep.subr.bf16.mxu0 0
        %986 = vmatpush1.bf16.msra.mxu0 0
        %987 = vmatprep.subr.bf16.mxu0 0
        %988 = vmatpush1.bf16.msra.mxu0 0
        %989 = vmatprep.subr.bf16.mxu0 0
        %990 = vmatpush1.bf16.msra.mxu0 0
        %991 = vmatprep.subr.bf16.mxu0 0
        %992 = vmatpush1.bf16.msra.mxu0 0
        %993 = vmatprep.subr.bf16.mxu0 0
        %994 = vmatpush1.bf16.msra.mxu0 0
        %995 = vmatprep.subr.bf16.mxu0 0
        %996 = vmatpush1.bf16.msra.mxu0 0
        %997 = vmatprep.subr.bf16.mxu0 0
        %998 = vmatpush1.bf16.msra.mxu0 0
        %999 = vmatprep.subr.bf16.mxu0 0
        %1000 = vmatpush1.bf16.msra.mxu0 0
        %1001 = vmatprep.subr.bf16.mxu0 0
        %1002 = vmatpush1.bf16.msra.mxu0 0
        %1003 = vmatprep.subr.bf16.mxu0 0
        %1004 = vmatpush1.bf16.msra.mxu0 0
        %1005 = vmatprep.subr.bf16.mxu0 0
        %1006 = vmatpush1.bf16.msra.mxu0 0
        %1007 = vmatprep.subr.bf16.mxu0 0
        %1008 = vmatpush1.bf16.msra.mxu0 0
        %1009 = vmatprep.mubr.bf16.mxu0 0
        %1010 = vmatmul.mubr.bf16.gmra.mrb[0].mxu0 %v643
        %v1011 = vpop.f32.mrb[0].mxu0
        %v1012 = vadd.f32 %v551, %v1011
        %v1013 = vpop.f32.mrb[0].mxu0
        %v1014 = vadd.f32 %v555, %v1013
        %v1015 = vpop.f32.mrb[0].mxu0
        %v1016 = vadd.f32 %v551, %v1015
        %v1017 = vpop.f32.mrb[0].mxu0
        %v1018 = vadd.f32 %v555, %v1017
        %1019 = vmatprep.mubr.bf16.mxu0 0
        %1020 = vmatmul.mubr.bf16.gmra.mrb[0].mxu0 %v646
        %v1021 = vpop.f32.mrb[0].mxu0
        %v1022 = vadd.f32 %v551, %v1021
        %v1023 = vpop.f32.mrb[0].mxu0
        %v1024 = vadd.f32 %v555, %v1023
        %v1025 = vpop.f32.mrb[0].mxu0
        %v1026 = vadd.f32 %v551, %v1025
        %v1027 = vpop.f32.mrb[0].mxu0
        %v1028 = vadd.f32 %v555, %v1027
        %1029 = vmatprep.mubr.bf16.mxu0 0
        %1030 = vmatmul.mubr.bf16.gmra.mrb[0].mxu0 %v649
        %v1031 = vpop.f32.mrb[0].mxu0
        %v1032 = vadd.f32 %v551, %v1031
        %v1033 = vpop.f32.mrb[0].mxu0
        %v1034 = vadd.f32 %v555, %v1033
        %v1035 = vpop.f32.mrb[0].mxu0
        %v1036 = vadd.f32 %v551, %v1035
        %v1037 = vpop.f32.mrb[0].mxu0
        %v1038 = vadd.f32 %v555, %v1037
        %1039 = vmatprep.mubr.bf16.mxu0 0
        %1040 = vmatmul.mubr.bf16.gmra.mrb[0].mxu0 %v652
        %v1041 = vpop.f32.mrb[0].mxu0
        %v1042 = vadd.f32 %v551, %v1041
        %v1043 = vpop.f32.mrb[0].mxu0
        %v1044 = vadd.f32 %v555, %v1043
        %v1045 = vpop.f32.mrb[0].mxu0
        %v1046 = vadd.f32 %v551, %v1045
        %v1047 = vpop.f32.mrb[0].mxu0
        %v1048 = vadd.f32 %v555, %v1047
        %1049 = vdwg.mxu0
        %v1050 = vxor.u32 %v720, 2147483648
        %v1051 = vxor.u32 %v722, 2147483648
        %v1052 = vxor.u32 %v793, 2147483648
        %v1053 = vxor.u32 %v795, 2147483648
        %v1054 = vxor.u32 %v866, 2147483648
        %v1055 = vxor.u32 %v868, 2147483648
        %v1056 = vxor.u32 %v939, 2147483648
        %v1057 = vxor.u32 %v941, 2147483648
        %v1058 = vxor.u32 %v1012, 2147483648
        %v1059 = vxor.u32 %v1014, 2147483648
        %v1060 = vxor.u32 %v724, 2147483648
        %v1061 = vxor.u32 %v726, 2147483648
        %v1062 = vxor.u32 %v797, 2147483648
        %v1063 = vxor.u32 %v799, 2147483648
        %v1064 = vxor.u32 %v870, 2147483648
        %v1065 = vxor.u32 %v872, 2147483648
        %v1066 = vxor.u32 %v943, 2147483648
        %v1067 = vxor.u32 %v945, 2147483648
        %v1068 = vxor.u32 %v1016, 2147483648
        %v1069 = vxor.u32 %v1018, 2147483648
        %v1070 = vxor.u32 %v730, 2147483648
        %v1071 = vxor.u32 %v732, 2147483648
        %v1072 = vxor.u32 %v803, 2147483648
        %v1073 = vxor.u32 %v805, 2147483648
        %v1074 = vxor.u32 %v876, 2147483648
        %v1075 = vxor.u32 %v878, 2147483648
        %v1076 = vxor.u32 %v949, 2147483648
        %v1077 = vxor.u32 %v951, 2147483648
        %v1078 = vxor.u32 %v1022, 2147483648
        %v1079 = vxor.u32 %v1024, 2147483648
        %v1080 = vxor.u32 %v734, 2147483648
        %v1081 = vxor.u32 %v736, 2147483648
        %v1082 = vxor.u32 %v807, 2147483648
        %v1083 = vxor.u32 %v809, 2147483648
        %v1084 = vxor.u32 %v880, 2147483648
        %v1085 = vxor.u32 %v882, 2147483648
        %v1086 = vxor.u32 %v953, 2147483648
        %v1087 = vxor.u32 %v955, 2147483648
        %v1088 = vxor.u32 %v1026, 2147483648
        %v1089 = vxor.u32 %v1028, 2147483648
        %v1090 = vxor.u32 %v740, 2147483648
        %v1091 = vxor.u32 %v742, 2147483648
        %v1092 = vxor.u32 %v813, 2147483648
        %v1093 = vxor.u32 %v815, 2147483648
        %v1094 = vxor.u32 %v886, 2147483648
        %v1095 = vxor.u32 %v888, 2147483648
        %v1096 = vxor.u32 %v959, 2147483648
        %v1097 = vxor.u32 %v961, 2147483648
        %v1098 = vxor.u32 %v1032, 2147483648
        %v1099 = vxor.u32 %v1034, 2147483648
        %v1100 = vxor.u32 %v744, 2147483648
        %v1101 = vxor.u32 %v746, 2147483648
        %v1102 = vxor.u32 %v817, 2147483648
        %v1103 = vxor.u32 %v819, 2147483648
        %v1104 = vxor.u32 %v890, 2147483648
        %v1105 = vxor.u32 %v892, 2147483648
        %v1106 = vxor.u32 %v963, 2147483648
        %v1107 = vxor.u32 %v965, 2147483648
        %v1108 = vxor.u32 %v1036, 2147483648
        %v1109 = vxor.u32 %v1038, 2147483648
        %v1110 = vxor.u32 %v750, 2147483648
        %v1111 = vxor.u32 %v752, 2147483648
        %v1112 = vxor.u32 %v823, 2147483648
        %v1113 = vxor.u32 %v825, 2147483648
        %v1114 = vxor.u32 %v896, 2147483648
        %v1115 = vxor.u32 %v898, 2147483648
        %v1116 = vxor.u32 %v969, 2147483648
        %v1117 = vxor.u32 %v971, 2147483648
        %v1118 = vxor.u32 %v1042, 2147483648
        %v1119 = vxor.u32 %v1044, 2147483648
        %v1120 = vxor.u32 %v754, 2147483648
        %v1121 = vxor.u32 %v756, 2147483648
        %v1122 = vxor.u32 %v827, 2147483648
        %v1123 = vxor.u32 %v829, 2147483648
        %v1124 = vxor.u32 %v900, 2147483648
        %v1125 = vxor.u32 %v902, 2147483648
        %v1126 = vxor.u32 %v973, 2147483648
        %v1127 = vxor.u32 %v975, 2147483648
        %v1128 = vxor.u32 %v1046, 2147483648
        %v1129 = vxor.u32 %v1048, 2147483648
        %v1130 = vmul.f32 %v1050, 1.442695
        %v1131 = vpow.pop %v1130
        %v1132 = vmul.f32 %v1051, 1.442695
        %v1133 = vpow.pop %v1132
        %v1134 = vmul.f32 %v1052, 1.442695
        %v1135 = vpow.pop %v1134
        %v1136 = vmul.f32 %v1053, 1.442695
        %v1137 = vpow.pop %v1136
        %v1138 = vmul.f32 %v1054, 1.442695
        %v1139 = vpow.pop %v1138
        %v1140 = vmul.f32 %v1055, 1.442695
        %v1141 = vpow.pop %v1140
        %v1142 = vmul.f32 %v1056, 1.442695
        %v1143 = vpow.pop %v1142
        %v1144 = vmul.f32 %v1057, 1.442695
        %v1145 = vpow.pop %v1144
        %v1146 = vmul.f32 %v1058, 1.442695
        %v1147 = vpow.pop %v1146
        %v1148 = vmul.f32 %v1059, 1.442695
        %v1149 = vpow.pop %v1148
        %v1150 = vmul.f32 %v1060, 1.442695
        %v1151 = vpow.pop %v1150
        %v1152 = vmul.f32 %v1061, 1.442695
        %v1153 = vpow.pop %v1152
        %v1154 = vmul.f32 %v1062, 1.442695
        %v1155 = vpow.pop %v1154
        %v1156 = vmul.f32 %v1063, 1.442695
        %v1157 = vpow.pop %v1156
        %v1158 = vmul.f32 %v1064, 1.442695
        %v1159 = vpow.pop %v1158
        %v1160 = vmul.f32 %v1065, 1.442695
        %v1161 = vpow.pop %v1160
        %v1162 = vmul.f32 %v1066, 1.442695
        %v1163 = vpow.pop %v1162
        %v1164 = vmul.f32 %v1067, 1.442695
        %v1165 = vpow.pop %v1164
        %v1166 = vmul.f32 %v1068, 1.442695
        %v1167 = vpow.pop %v1166
        %v1168 = vmul.f32 %v1069, 1.442695
        %v1169 = vpow.pop %v1168
        %v1170 = vmul.f32 %v1070, 1.442695
        %v1171 = vpow.pop %v1170
        %v1172 = vmul.f32 %v1071, 1.442695
        %v1173 = vpow.pop %v1172
        %v1174 = vmul.f32 %v1072, 1.442695
        %v1175 = vpow.pop %v1174
        %v1176 = vmul.f32 %v1073, 1.442695
        %v1177 = vpow.pop %v1176
        %v1178 = vmul.f32 %v1074, 1.442695
        %v1179 = vpow.pop %v1178
        %v1180 = vmul.f32 %v1075, 1.442695
        %v1181 = vpow.pop %v1180
        %v1182 = vmul.f32 %v1076, 1.442695
        %v1183 = vpow.pop %v1182
        %v1184 = vmul.f32 %v1077, 1.442695
        %v1185 = vpow.pop %v1184
        %v1186 = vmul.f32 %v1078, 1.442695
        %v1187 = vpow.pop %v1186
        %v1188 = vmul.f32 %v1079, 1.442695
        %v1189 = vpow.pop %v1188
        %v1190 = vmul.f32 %v1080, 1.442695
        %v1191 = vpow.pop %v1190
        %v1192 = vmul.f32 %v1081, 1.442695
        %v1193 = vpow.pop %v1192
        %v1194 = vmul.f32 %v1082, 1.442695
        %v1195 = vpow.pop %v1194
        %v1196 = vmul.f32 %v1083, 1.442695
        %v1197 = vpow.pop %v1196
        %v1198 = vmul.f32 %v1084, 1.442695
        %v1199 = vpow.pop %v1198
        %v1200 = vmul.f32 %v1085, 1.442695
        %v1201 = vpow.pop %v1200
        %v1202 = vmul.f32 %v1086, 1.442695
        %v1203 = vpow.pop %v1202
        %v1204 = vmul.f32 %v1087, 1.442695
        %v1205 = vpow.pop %v1204
        %v1206 = vmul.f32 %v1088, 1.442695
        %v1207 = vpow.pop %v1206
        %v1208 = vmul.f32 %v1089, 1.442695
        %v1209 = vpow.pop %v1208
        %v1210 = vmul.f32 %v1090, 1.442695
        %v1211 = vpow.pop %v1210
        %v1212 = vmul.f32 %v1091, 1.442695
        %v1213 = vpow.pop %v1212
        %v1214 = vmul.f32 %v1092, 1.442695
        %v1215 = vpow.pop %v1214
        %v1216 = vmul.f32 %v1093, 1.442695
        %v1217 = vpow.pop %v1216
        %v1218 = vmul.f32 %v1094, 1.442695
        %v1219 = vpow.pop %v1218
        %v1220 = vmul.f32 %v1095, 1.442695
        %v1221 = vpow.pop %v1220
        %v1222 = vmul.f32 %v1096, 1.442695
        %v1223 = vpow.pop %v1222
        %v1224 = vmul.f32 %v1097, 1.442695
        %v1225 = vpow.pop %v1224
        %v1226 = vmul.f32 %v1098, 1.442695
        %v1227 = vpow.pop %v1226
        %v1228 = vmul.f32 %v1099, 1.442695
        %v1229 = vpow.pop %v1228
        %v1230 = vmul.f32 %v1100, 1.442695
        %v1231 = vpow.pop %v1230
        %v1232 = vmul.f32 %v1101, 1.442695
        %v1233 = vpow.pop %v1232
        %v1234 = vmul.f32 %v1102, 1.442695
        %v1235 = vpow.pop %v1234
        %v1236 = vmul.f32 %v1103, 1.442695
        %v1237 = vpow.pop %v1236
        %v1238 = vmul.f32 %v1104, 1.442695
        %v1239 = vpow.pop %v1238
        %v1240 = vmul.f32 %v1105, 1.442695
        %v1241 = vpow.pop %v1240
        %v1242 = vmul.f32 %v1106, 1.442695
        %v1243 = vpow.pop %v1242
        %v1244 = vmul.f32 %v1107, 1.442695
        %v1245 = vpow.pop %v1244
        %v1246 = vmul.f32 %v1108, 1.442695
        %v1247 = vpow.pop %v1246
        %v1248 = vmul.f32 %v1109, 1.442695
        %v1249 = vpow.pop %v1248
        %v1250 = vmul.f32 %v1110, 1.442695
        %v1251 = vpow.pop %v1250
        %v1252 = vmul.f32 %v1111, 1.442695
        %v1253 = vpow.pop %v1252
        %v1254 = vmul.f32 %v1112, 1.442695
        %v1255 = vpow.pop %v1254
        %v1256 = vmul.f32 %v1113, 1.442695
        %v1257 = vpow.pop %v1256
        %v1258 = vmul.f32 %v1114, 1.442695
        %v1259 = vpow.pop %v1258
        %v1260 = vmul.f32 %v1115, 1.442695
        %v1261 = vpow.pop %v1260
        %v1262 = vmul.f32 %v1116, 1.442695
        %v1263 = vpow.pop %v1262
        %v1264 = vmul.f32 %v1117, 1.442695
        %v1265 = vpow.pop %v1264
        %v1266 = vmul.f32 %v1118, 1.442695
        %v1267 = vpow.pop %v1266
        %v1268 = vmul.f32 %v1119, 1.442695
        %v1269 = vpow.pop %v1268
        %v1270 = vmul.f32 %v1120, 1.442695
        %v1271 = vpow.pop %v1270
        %v1272 = vmul.f32 %v1121, 1.442695
        %v1273 = vpow.pop %v1272
        %v1274 = vmul.f32 %v1122, 1.442695
        %v1275 = vpow.pop %v1274
        %v1276 = vmul.f32 %v1123, 1.442695
        %v1277 = vpow.pop %v1276
        %v1278 = vmul.f32 %v1124, 1.442695
        %v1279 = vpow.pop %v1278
        %v1280 = vmul.f32 %v1125, 1.442695
        %v1281 = vpow.pop %v1280
        %v1282 = vmul.f32 %v1126, 1.442695
        %v1283 = vpow.pop %v1282
        %v1284 = vmul.f32 %v1127, 1.442695
        %v1285 = vpow.pop %v1284
        %v1286 = vmul.f32 %v1128, 1.442695
        %v1287 = vpow.pop %v1286
        %v1288 = vmul.f32 %v1129, 1.442695
        %v1289 = vpow.pop %v1288
        %v1290 = vadd.f32 %v1131, 1.0
        %v1291 = vadd.f32 %v1133, 1.0
        %v1292 = vadd.f32 %v1135, 1.0
        %v1293 = vadd.f32 %v1137, 1.0
        %v1294 = vadd.f32 %v1139, 1.0
        %v1295 = vadd.f32 %v1141, 1.0
        %v1296 = vadd.f32 %v1143, 1.0
        %v1297 = vadd.f32 %v1145, 1.0
        %v1298 = vadd.f32 %v1147, 1.0
        %v1299 = vadd.f32 %v1149, 1.0
        %v1300 = vadd.f32 %v1151, 1.0
        %v1301 = vadd.f32 %v1153, 1.0
        %v1302 = vadd.f32 %v1155, 1.0
        %v1303 = vadd.f32 %v1157, 1.0
        %v1304 = vadd.f32 %v1159, 1.0
        %v1305 = vadd.f32 %v1161, 1.0
        %v1306 = vadd.f32 %v1163, 1.0
        %v1307 = vadd.f32 %v1165, 1.0
        %v1308 = vadd.f32 %v1167, 1.0
        %v1309 = vadd.f32 %v1169, 1.0
        %v1310 = vadd.f32 %v1171, 1.0
        %v1311 = vadd.f32 %v1173, 1.0
        %v1312 = vadd.f32 %v1175, 1.0
        %v1313 = vadd.f32 %v1177, 1.0
        %v1314 = vadd.f32 %v1179, 1.0
        %v1315 = vadd.f32 %v1181, 1.0
        %v1316 = vadd.f32 %v1183, 1.0
        %v1317 = vadd.f32 %v1185, 1.0
        %v1318 = vadd.f32 %v1187, 1.0
        %v1319 = vadd.f32 %v1189, 1.0
        %v1320 = vadd.f32 %v1191, 1.0
        %v1321 = vadd.f32 %v1193, 1.0
        %v1322 = vadd.f32 %v1195, 1.0
        %v1323 = vadd.f32 %v1197, 1.0
        %v1324 = vadd.f32 %v1199, 1.0
        %v1325 = vadd.f32 %v1201, 1.0
        %v1326 = vadd.f32 %v1203, 1.0
        %v1327 = vadd.f32 %v1205, 1.0
        %v1328 = vadd.f32 %v1207, 1.0
        %v1329 = vadd.f32 %v1209, 1.0
        %v1330 = vadd.f32 %v1211, 1.0
        %v1331 = vadd.f32 %v1213, 1.0
        %v1332 = vadd.f32 %v1215, 1.0
        %v1333 = vadd.f32 %v1217, 1.0
        %v1334 = vadd.f32 %v1219, 1.0
        %v1335 = vadd.f32 %v1221, 1.0
        %v1336 = vadd.f32 %v1223, 1.0
        %v1337 = vadd.f32 %v1225, 1.0
        %v1338 = vadd.f32 %v1227, 1.0
        %v1339 = vadd.f32 %v1229, 1.0
        %v1340 = vadd.f32 %v1231, 1.0
        %v1341 = vadd.f32 %v1233, 1.0
        %v1342 = vadd.f32 %v1235, 1.0
        %v1343 = vadd.f32 %v1237, 1.0
        %v1344 = vadd.f32 %v1239, 1.0
        %v1345 = vadd.f32 %v1241, 1.0
        %v1346 = vadd.f32 %v1243, 1.0
        %v1347 = vadd.f32 %v1245, 1.0
        %v1348 = vadd.f32 %v1247, 1.0
        %v1349 = vadd.f32 %v1249, 1.0
        %v1350 = vadd.f32 %v1251, 1.0
        %v1351 = vadd.f32 %v1253, 1.0
        %v1352 = vadd.f32 %v1255, 1.0
        %v1353 = vadd.f32 %v1257, 1.0
        %v1354 = vadd.f32 %v1259, 1.0
        %v1355 = vadd.f32 %v1261, 1.0
        %v1356 = vadd.f32 %v1263, 1.0
        %v1357 = vadd.f32 %v1265, 1.0
        %v1358 = vadd.f32 %v1267, 1.0
        %v1359 = vadd.f32 %v1269, 1.0
        %v1360 = vadd.f32 %v1271, 1.0
        %v1361 = vadd.f32 %v1273, 1.0
        %v1362 = vadd.f32 %v1275, 1.0
        %v1363 = vadd.f32 %v1277, 1.0
        %v1364 = vadd.f32 %v1279, 1.0
        %v1365 = vadd.f32 %v1281, 1.0
        %v1366 = vadd.f32 %v1283, 1.0
        %v1367 = vadd.f32 %v1285, 1.0
        %v1368 = vadd.f32 %v1287, 1.0
        %v1369 = vadd.f32 %v1289, 1.0
        %v1370 = vrcp.pop %v1290
        %v1371 = vmul.f32 1.0, %v1370
        %v1372 = vrcp.pop %v1291
        %v1373 = vmul.f32 1.0, %v1372
        %v1374 = vrcp.pop %v1292
        %v1375 = vmul.f32 1.0, %v1374
        %v1376 = vrcp.pop %v1293
        %v1377 = vmul.f32 1.0, %v1376
        %v1378 = vrcp.pop %v1294
        %v1379 = vmul.f32 1.0, %v1378
        %v1380 = vrcp.pop %v1295
        %v1381 = vmul.f32 1.0, %v1380
        %v1382 = vrcp.pop %v1296
        %v1383 = vmul.f32 1.0, %v1382
        %v1384 = vrcp.pop %v1297
        %v1385 = vmul.f32 1.0, %v1384
        %v1386 = vrcp.pop %v1298
        %v1387 = vmul.f32 1.0, %v1386
        %v1388 = vrcp.pop %v1299
        %v1389 = vmul.f32 1.0, %v1388
        %v1390 = vrcp.pop %v1300
        %v1391 = vmul.f32 1.0, %v1390
        %v1392 = vrcp.pop %v1301
        %v1393 = vmul.f32 1.0, %v1392
        %v1394 = vrcp.pop %v1302
        %v1395 = vmul.f32 1.0, %v1394
        %v1396 = vrcp.pop %v1303
        %v1397 = vmul.f32 1.0, %v1396
        %v1398 = vrcp.pop %v1304
        %v1399 = vmul.f32 1.0, %v1398
        %v1400 = vrcp.pop %v1305
        %v1401 = vmul.f32 1.0, %v1400
        %v1402 = vrcp.pop %v1306
        %v1403 = vmul.f32 1.0, %v1402
        %v1404 = vrcp.pop %v1307
        %v1405 = vmul.f32 1.0, %v1404
        %v1406 = vrcp.pop %v1308
        %v1407 = vmul.f32 1.0, %v1406
        %v1408 = vrcp.pop %v1309
        %v1409 = vmul.f32 1.0, %v1408
        %v1410 = vrcp.pop %v1310
        %v1411 = vmul.f32 1.0, %v1410
        %v1412 = vrcp.pop %v1311
        %v1413 = vmul.f32 1.0, %v1412
        %v1414 = vrcp.pop %v1312
        %v1415 = vmul.f32 1.0, %v1414
        %v1416 = vrcp.pop %v1313
        %v1417 = vmul.f32 1.0, %v1416
        %v1418 = vrcp.pop %v1314
        %v1419 = vmul.f32 1.0, %v1418
        %v1420 = vrcp.pop %v1315
        %v1421 = vmul.f32 1.0, %v1420
        %v1422 = vrcp.pop %v1316
        %v1423 = vmul.f32 1.0, %v1422
        %v1424 = vrcp.pop %v1317
        %v1425 = vmul.f32 1.0, %v1424
        %v1426 = vrcp.pop %v1318
        %v1427 = vmul.f32 1.0, %v1426
        %v1428 = vrcp.pop %v1319
        %v1429 = vmul.f32 1.0, %v1428
        %v1430 = vrcp.pop %v1320
        %v1431 = vmul.f32 1.0, %v1430
        %v1432 = vrcp.pop %v1321
        %v1433 = vmul.f32 1.0, %v1432
        %v1434 = vrcp.pop %v1322
        %v1435 = vmul.f32 1.0, %v1434
        %v1436 = vrcp.pop %v1323
        %v1437 = vmul.f32 1.0, %v1436
        %v1438 = vrcp.pop %v1324
        %v1439 = vmul.f32 1.0, %v1438
        %v1440 = vrcp.pop %v1325
        %v1441 = vmul.f32 1.0, %v1440
        %v1442 = vrcp.pop %v1326
        %v1443 = vmul.f32 1.0, %v1442
        %v1444 = vrcp.pop %v1327
        %v1445 = vmul.f32 1.0, %v1444
        %v1446 = vrcp.pop %v1328
        %v1447 = vmul.f32 1.0, %v1446
        %v1448 = vrcp.pop %v1329
        %v1449 = vmul.f32 1.0, %v1448
        %v1450 = vrcp.pop %v1330
        %v1451 = vmul.f32 1.0, %v1450
        %v1452 = vrcp.pop %v1331
        %v1453 = vmul.f32 1.0, %v1452
        %v1454 = vrcp.pop %v1332
        %v1455 = vmul.f32 1.0, %v1454
        %v1456 = vrcp.pop %v1333
        %v1457 = vmul.f32 1.0, %v1456
        %v1458 = vrcp.pop %v1334
        %v1459 = vmul.f32 1.0, %v1458
        %v1460 = vrcp.pop %v1335
        %v1461 = vmul.f32 1.0, %v1460
        %v1462 = vrcp.pop %v1336
        %v1463 = vmul.f32 1.0, %v1462
        %v1464 = vrcp.pop %v1337
        %v1465 = vmul.f32 1.0, %v1464
        %v1466 = vrcp.pop %v1338
        %v1467 = vmul.f32 1.0, %v1466
        %v1468 = vrcp.pop %v1339
        %v1469 = vmul.f32 1.0, %v1468
        %v1470 = vrcp.pop %v1340
        %v1471 = vmul.f32 1.0, %v1470
        %v1472 = vrcp.pop %v1341
        %v1473 = vmul.f32 1.0, %v1472
        %v1474 = vrcp.pop %v1342
        %v1475 = vmul.f32 1.0, %v1474
        %v1476 = vrcp.pop %v1343
        %v1477 = vmul.f32 1.0, %v1476
        %v1478 = vrcp.pop %v1344
        %v1479 = vmul.f32 1.0, %v1478
        %v1480 = vrcp.pop %v1345
        %v1481 = vmul.f32 1.0, %v1480
        %v1482 = vrcp.pop %v1346
        %v1483 = vmul.f32 1.0, %v1482
        %v1484 = vrcp.pop %v1347
        %v1485 = vmul.f32 1.0, %v1484
        %v1486 = vrcp.pop %v1348
        %v1487 = vmul.f32 1.0, %v1486
        %v1488 = vrcp.pop %v1349
        %v1489 = vmul.f32 1.0, %v1488
        %v1490 = vrcp.pop %v1350
        %v1491 = vmul.f32 1.0, %v1490
        %v1492 = vrcp.pop %v1351
        %v1493 = vmul.f32 1.0, %v1492
        %v1494 = vrcp.pop %v1352
        %v1495 = vmul.f32 1.0, %v1494
        %v1496 = vrcp.pop %v1353
        %v1497 = vmul.f32 1.0, %v1496
        %v1498 = vrcp.pop %v1354
        %v1499 = vmul.f32 1.0, %v1498
        %v1500 = vrcp.pop %v1355
        %v1501 = vmul.f32 1.0, %v1500
        %v1502 = vrcp.pop %v1356
        %v1503 = vmul.f32 1.0, %v1502
        %v1504 = vrcp.pop %v1357
        %v1505 = vmul.f32 1.0, %v1504
        %v1506 = vrcp.pop %v1358
        %v1507 = vmul.f32 1.0, %v1506
        %v1508 = vrcp.pop %v1359
        %v1509 = vmul.f32 1.0, %v1508
        %v1510 = vrcp.pop %v1360
        %v1511 = vmul.f32 1.0, %v1510
        %v1512 = vrcp.pop %v1361
        %v1513 = vmul.f32 1.0, %v1512
        %v1514 = vrcp.pop %v1362
        %v1515 = vmul.f32 1.0, %v1514
        %v1516 = vrcp.pop %v1363
        %v1517 = vmul.f32 1.0, %v1516
        %v1518 = vrcp.pop %v1364
        %v1519 = vmul.f32 1.0, %v1518
        %v1520 = vrcp.pop %v1365
        %v1521 = vmul.f32 1.0, %v1520
        %v1522 = vrcp.pop %v1366
        %v1523 = vmul.f32 1.0, %v1522
        %v1524 = vrcp.pop %v1367
        %v1525 = vmul.f32 1.0, %v1524
        %v1526 = vrcp.pop %v1368
        %v1527 = vmul.f32 1.0, %v1526
        %v1528 = vrcp.pop %v1369
        %v1529 = vmul.f32 1.0, %v1528
        %v1530 = vmul.f32 %v720, %v1371
        %v1531 = vmul.f32 %v722, %v1373
        %v1532 = vmul.f32 %v793, %v1375
        %v1533 = vmul.f32 %v795, %v1377
        %v1534 = vmul.f32 %v866, %v1379
        %v1535 = vmul.f32 %v868, %v1381
        %v1536 = vmul.f32 %v939, %v1383
        %v1537 = vmul.f32 %v941, %v1385
        %v1538 = vmul.f32 %v1012, %v1387
        %v1539 = vmul.f32 %v1014, %v1389
        %v1540 = vmul.f32 %v724, %v1391
        %v1541 = vmul.f32 %v726, %v1393
        %v1542 = vmul.f32 %v797, %v1395
        %v1543 = vmul.f32 %v799, %v1397
        %v1544 = vmul.f32 %v870, %v1399
        %v1545 = vmul.f32 %v872, %v1401
        %v1546 = vmul.f32 %v943, %v1403
        %v1547 = vmul.f32 %v945, %v1405
        %v1548 = vmul.f32 %v1016, %v1407
        %v1549 = vmul.f32 %v1018, %v1409
        %v1550 = vmul.f32 %v730, %v1411
        %v1551 = vmul.f32 %v732, %v1413
        %v1552 = vmul.f32 %v803, %v1415
        %v1553 = vmul.f32 %v805, %v1417
        %v1554 = vmul.f32 %v876, %v1419
        %v1555 = vmul.f32 %v878, %v1421
        %v1556 = vmul.f32 %v949, %v1423
        %v1557 = vmul.f32 %v951, %v1425
        %v1558 = vmul.f32 %v1022, %v1427
        %v1559 = vmul.f32 %v1024, %v1429
        %v1560 = vmul.f32 %v734, %v1431
        %v1561 = vmul.f32 %v736, %v1433
        %v1562 = vmul.f32 %v807, %v1435
        %v1563 = vmul.f32 %v809, %v1437
        %v1564 = vmul.f32 %v880, %v1439
        %v1565 = vmul.f32 %v882, %v1441
        %v1566 = vmul.f32 %v953, %v1443
        %v1567 = vmul.f32 %v955, %v1445
        %v1568 = vmul.f32 %v1026, %v1447
        %v1569 = vmul.f32 %v1028, %v1449
        %v1570 = vmul.f32 %v740, %v1451
        %v1571 = vmul.f32 %v742, %v1453
        %v1572 = vmul.f32 %v813, %v1455
        %v1573 = vmul.f32 %v815, %v1457
        %v1574 = vmul.f32 %v886, %v1459
        %v1575 = vmul.f32 %v888, %v1461
        %v1576 = vmul.f32 %v959, %v1463
        %v1577 = vmul.f32 %v961, %v1465
        %v1578 = vmul.f32 %v1032, %v1467
        %v1579 = vmul.f32 %v1034, %v1469
        %v1580 = vmul.f32 %v744, %v1471
        %v1581 = vmul.f32 %v746, %v1473
        %v1582 = vmul.f32 %v817, %v1475
        %v1583 = vmul.f32 %v819, %v1477
        %v1584 = vmul.f32 %v890, %v1479
        %v1585 = vmul.f32 %v892, %v1481
        %v1586 = vmul.f32 %v963, %v1483
        %v1587 = vmul.f32 %v965, %v1485
        %v1588 = vmul.f32 %v1036, %v1487
        %v1589 = vmul.f32 %v1038, %v1489
        %v1590 = vmul.f32 %v750, %v1491
        %v1591 = vmul.f32 %v752, %v1493
        %v1592 = vmul.f32 %v823, %v1495
        %v1593 = vmul.f32 %v825, %v1497
        %v1594 = vmul.f32 %v896, %v1499
        %v1595 = vmul.f32 %v898, %v1501
        %v1596 = vmul.f32 %v969, %v1503
        %v1597 = vmul.f32 %v971, %v1505
        %v1598 = vmul.f32 %v1042, %v1507
        %v1599 = vmul.f32 %v1044, %v1509
        %v1600 = vmul.f32 %v754, %v1511
        %v1601 = vmul.f32 %v756, %v1513
        %v1602 = vmul.f32 %v827, %v1515
        %v1603 = vmul.f32 %v829, %v1517
        %v1604 = vmul.f32 %v900, %v1519
        %v1605 = vmul.f32 %v902, %v1521
        %v1606 = vmul.f32 %v973, %v1523
        %v1607 = vmul.f32 %v975, %v1525
        %v1608 = vmul.f32 %v1046, %v1527
        %v1609 = vmul.f32 %v1048, %v1529
        %v1610 = vld [vmem:[#allocation2] sm:$0xff]
        %v1611 = vld [vmem:[#allocation2 + $0x8] sm:$0x3]
        %v1612 = vadd.f32 %v1530, %v1540
        %v1613 = vadd.f32 %v1612, %v1550
        %v1614 = vadd.f32 %v1613, %v1560
        %v1615 = vadd.f32 %v1614, %v1570
        %v1616 = vadd.f32 %v1615, %v1580
        %v1617 = vadd.f32 %v1616, %v1590
        %v1618 = vadd.f32 %v1617, %v1600
        %v1619 = vrot.slane %v1618, 4
        %v1620 = vadd.f32 %v1618, %v1619
        %v1621 = vrot.slane %v1620, 2
        %v1622 = vadd.f32 %v1620, %v1621
        %v1623 = vrot.slane %v1622, 1
        %v1624 = vadd.f32 %v1622, %v1623
        %v1625 = vadd.f32 %v1531, %v1541
        %v1626 = vadd.f32 %v1625, %v1551
        %v1627 = vadd.f32 %v1626, %v1561
        %v1628 = vadd.f32 %v1627, %v1571
        %v1629 = vadd.f32 %v1628, %v1581
        %v1630 = vadd.f32 %v1629, %v1591
        %v1631 = vadd.f32 %v1630, %v1601
        %v1632 = vrot.slane %v1631, 4
        %v1633 = vadd.f32 %v1631, %v1632
        %v1634 = vrot.slane %v1633, 2
        %v1635 = vadd.f32 %v1633, %v1634
        %v1636 = vrot.slane %v1635, 1
        %v1637 = vadd.f32 %v1635, %v1636
        %v1638 = vadd.f32 %v1532, %v1542
        %v1639 = vadd.f32 %v1638, %v1552
        %v1640 = vadd.f32 %v1639, %v1562
        %v1641 = vadd.f32 %v1640, %v1572
        %v1642 = vadd.f32 %v1641, %v1582
        %v1643 = vadd.f32 %v1642, %v1592
        %v1644 = vadd.f32 %v1643, %v1602
        %v1645 = vrot.slane %v1644, 4
        %v1646 = vadd.f32 %v1644, %v1645
        %v1647 = vrot.slane %v1646, 2
        %v1648 = vadd.f32 %v1646, %v1647
        %v1649 = vrot.slane %v1648, 1
        %v1650 = vadd.f32 %v1648, %v1649
        %v1651 = vadd.f32 %v1533, %v1543
        %v1652 = vadd.f32 %v1651, %v1553
        %v1653 = vadd.f32 %v1652, %v1563
        %v1654 = vadd.f32 %v1653, %v1573
        %v1655 = vadd.f32 %v1654, %v1583
        %v1656 = vadd.f32 %v1655, %v1593
        %v1657 = vadd.f32 %v1656, %v1603
        %v1658 = vrot.slane %v1657, 4
        %v1659 = vadd.f32 %v1657, %v1658
        %v1660 = vrot.slane %v1659, 2
        %v1661 = vadd.f32 %v1659, %v1660
        %v1662 = vrot.slane %v1661, 1
        %v1663 = vadd.f32 %v1661, %v1662
        %v1664 = vadd.f32 %v1534, %v1544
        %v1665 = vadd.f32 %v1664, %v1554
        %v1666 = vadd.f32 %v1665, %v1564
        %v1667 = vadd.f32 %v1666, %v1574
        %v1668 = vadd.f32 %v1667, %v1584
        %v1669 = vadd.f32 %v1668, %v1594
        %v1670 = vadd.f32 %v1669, %v1604
        %v1671 = vrot.slane %v1670, 4
        %v1672 = vadd.f32 %v1670, %v1671
        %v1673 = vrot.slane %v1672, 2
        %v1674 = vadd.f32 %v1672, %v1673
        %v1675 = vrot.slane %v1674, 1
        %v1676 = vadd.f32 %v1674, %v1675
        %v1677 = vadd.f32 %v1535, %v1545
        %v1678 = vadd.f32 %v1677, %v1555
        %v1679 = vadd.f32 %v1678, %v1565
        %v1680 = vadd.f32 %v1679, %v1575
        %v1681 = vadd.f32 %v1680, %v1585
        %v1682 = vadd.f32 %v1681, %v1595
        %v1683 = vadd.f32 %v1682, %v1605
        %v1684 = vrot.slane %v1683, 4
        %v1685 = vadd.f32 %v1683, %v1684
        %v1686 = vrot.slane %v1685, 2
        %v1687 = vadd.f32 %v1685, %v1686
        %v1688 = vrot.slane %v1687, 1
        %v1689 = vadd.f32 %v1687, %v1688
        %v1690 = vadd.f32 %v1536, %v1546
        %v1691 = vadd.f32 %v1690, %v1556
        %v1692 = vadd.f32 %v1691, %v1566
        %v1693 = vadd.f32 %v1692, %v1576
        %v1694 = vadd.f32 %v1693, %v1586
        %v1695 = vadd.f32 %v1694, %v1596
        %v1696 = vadd.f32 %v1695, %v1606
        %v1697 = vrot.slane %v1696, 4
        %v1698 = vadd.f32 %v1696, %v1697
        %v1699 = vrot.slane %v1698, 2
        %v1700 = vadd.f32 %v1698, %v1699
        %v1701 = vrot.slane %v1700, 1
        %v1702 = vadd.f32 %v1700, %v1701
        %v1703 = vadd.f32 %v1537, %v1547
        %v1704 = vadd.f32 %v1703, %v1557
        %v1705 = vadd.f32 %v1704, %v1567
        %v1706 = vadd.f32 %v1705, %v1577
        %v1707 = vadd.f32 %v1706, %v1587
        %v1708 = vadd.f32 %v1707, %v1597
        %v1709 = vadd.f32 %v1708, %v1607
        %v1710 = vrot.slane %v1709, 4
        %v1711 = vadd.f32 %v1709, %v1710
        %v1712 = vrot.slane %v1711, 2
        %v1713 = vadd.f32 %v1711, %v1712
        %v1714 = vrot.slane %v1713, 1
        %v1715 = vadd.f32 %v1713, %v1714
        %v1716 = vadd.f32 %v1538, %v1548
        %v1717 = vadd.f32 %v1716, %v1558
        %v1718 = vadd.f32 %v1717, %v1568
        %v1719 = vadd.f32 %v1718, %v1578
        %v1720 = vadd.f32 %v1719, %v1588
        %v1721 = vadd.f32 %v1720, %v1598
        %v1722 = vadd.f32 %v1721, %v1608
        %v1723 = vrot.slane %v1722, 4
        %v1724 = vadd.f32 %v1722, %v1723
        %v1725 = vrot.slane %v1724, 2
        %v1726 = vadd.f32 %v1724, %v1725
        %v1727 = vrot.slane %v1726, 1
        %v1728 = vadd.f32 %v1726, %v1727
        %v1729 = vadd.f32 %v1539, %v1549
        %v1730 = vadd.f32 %v1729, %v1559
        %v1731 = vadd.f32 %v1730, %v1569
        %v1732 = vadd.f32 %v1731, %v1579
        %v1733 = vadd.f32 %v1732, %v1589
        %v1734 = vadd.f32 %v1733, %v1599
        %v1735 = vadd.f32 %v1734, %v1609
        %v1736 = vrot.slane %v1735, 4
        %v1737 = vadd.f32 %v1735, %v1736
        %v1738 = vrot.slane %v1737, 2
        %v1739 = vadd.f32 %v1737, %v1738
        %v1740 = vrot.slane %v1739, 1
        %v1741 = vadd.f32 %v1739, %v1740
        %v1752 = vcombine.low %v1624, %v1637
        %v1753 = vcombine.low %v1650, %v1663
        %v1754 = vcombine.low %v1676, %v1689
        %v1755 = vcombine.low %v1702, %v1715
        %v1757 = vunpack.c.l.s4 1966171168
        %v1758 = vunpack.c.0.s8 %v1757
        %v1759 = vlaneseq
        %v1760 = vshrl.u32 %v1759, 7
        %v1761 = vsub.s32 %v1758, %v1760
        %v1762 = vrot.slane %v1752, %v1761
        %v1764 = vunpack.c.l.s4 1966171168
        %v1765 = vunpack.c.0.s8 %v1764
        %v1766 = vlaneseq
        %v1767 = vshrl.u32 %v1766, 7
        %v1768 = vsub.s32 %v1765, %v1767
        %v1769 = vrot.slane %v1753, %v1768
        %v1771 = vunpack.c.l.s4 1966171168
        %v1772 = vunpack.c.0.s8 %v1771
        %v1773 = vlaneseq
        %v1774 = vshrl.u32 %v1773, 7
        %v1775 = vsub.s32 %v1772, %v1774
        %v1776 = vrot.slane %v1754, %v1775
        %v1778 = vunpack.c.l.s4 1966171168
        %v1779 = vunpack.c.0.s8 %v1778
        %v1780 = vlaneseq
        %v1781 = vshrl.u32 %v1780, 7
        %v1782 = vsub.s32 %v1779, %v1781
        %v1783 = vrot.slane %v1755, %v1782
        %v1784 = vcombine.low %v1762, %v1769
        %v1785 = vcombine.low %v1776, %v1783
        %v1787 = vunpack.c.l.s4 1966171168
        %v1788 = vunpack.c.0.s8 %v1787
        %v1789 = vlaneseq
        %v1790 = vshrl.u32 %v1789, 7
        %v1791 = vsub.s32 %v1788, %v1790
        %v1792 = vrot.slane %v1784, %v1791
        %v1794 = vunpack.c.l.s4 1966171168
        %v1795 = vunpack.c.0.s8 %v1794
        %v1796 = vlaneseq
        %v1797 = vshrl.u32 %v1796, 7
        %v1798 = vsub.s32 %v1795, %v1797
        %v1799 = vrot.slane %v1785, %v1798
        %v1800 = vcombine.low %v1792, %v1799
        %v1801 = vcombine.low %v1728, %v1741
        %v1803 = vunpack.c.l.s4 1966171168
        %v1804 = vunpack.c.0.s8 %v1803
        %v1805 = vlaneseq
        %v1806 = vshrl.u32 %v1805, 7
        %v1807 = vsub.s32 %v1804, %v1806
        %v1808 = vrot.slane %v1801, %v1807
        %v1810 = vunpack.c.l.s4 1966171168
        %v1811 = vunpack.c.0.s8 %v1810
        %v1812 = vlaneseq
        %v1813 = vshrl.u32 %v1812, 7
        %v1814 = vsub.s32 %v1811, %v1813
        %v1815 = vrot.slane %v1808, %v1814
        %v1818 = vadd.f32 %v1610, %v1800
        %v1819 = vadd.f32 %v1611, %v1815
        %1820 = vst [vmem:[#allocation2] sm:$0xff] %v1818
        %v1821 = vlaneseq
        %vm1822 = vcmp.ge.s32.totalorder %v1821, 0
        %vm1823 = vcmp.lt.s32.totalorder %v1821, 256
        %vm1824 = vmand %vm1822, %vm1823
        %1825 = vst.msk [vmem:[#allocation2 + $0x8] sm:$0x3] %vm1824, %v1819
        // Predicated region
        $region53: #{base_model_forward.1} parent=47 // pred_check
          %p1826 = pneg %p298
        $region54: #{base_model_forward.1} parent=47 // pred_check_branch
          %1828 = sbr.rel (%p1826) target = $region56
        $region55: #{base_model_forward.1} parent=47 // pred_region
          %v1829 = vld [vmem:[#allocation2] sm:$0xff]
          %v1830 = vld [vmem:[#allocation2 + $0x8] sm:$0x3]
          %v1831 = vmul.f32 %v1829, 0.015625
          %v1832 = vmul.f32 %v1830, 0.015625
          %v1835 = vlaneseq
          %v1836 = vshrl.u32 %v1835, 7
          %v1837 = vsub.s32 0, %v1836
          %v1838 = vrot.slane %v1831, %v1837
          %v1839 = vlaneseq
          %v1840 = vshrl.u32 %v1839, 7
          %v1841 = vsub.s32 1, %v1840
          %v1842 = vrot.slane %v1831, %v1841
          %v1843 = vlaneseq
          %v1844 = vshrl.u32 %v1843, 7
          %v1845 = vsub.s32 2, %v1844
          %v1846 = vrot.slane %v1831, %v1845
          %v1847 = vlaneseq
          %v1848 = vshrl.u32 %v1847, 7
          %v1849 = vsub.s32 3, %v1848
          %v1850 = vrot.slane %v1831, %v1849
          %v1851 = vlaneseq
          %v1852 = vshrl.u32 %v1851, 7
          %v1853 = vsub.s32 4, %v1852
          %v1854 = vrot.slane %v1831, %v1853
          %v1855 = vlaneseq
          %v1856 = vshrl.u32 %v1855, 7
          %v1857 = vsub.s32 5, %v1856
          %v1858 = vrot.slane %v1831, %v1857
          %v1859 = vlaneseq
          %v1860 = vshrl.u32 %v1859, 7
          %v1861 = vsub.s32 6, %v1860
          %v1862 = vrot.slane %v1831, %v1861
          %v1863 = vlaneseq
          %v1864 = vshrl.u32 %v1863, 7
          %v1865 = vsub.s32 7, %v1864
          %v1866 = vrot.slane %v1831, %v1865
          %v1867 = vlaneseq
          %v1868 = vshrl.u32 %v1867, 7
          %v1869 = vsub.s32 0, %v1868
          %v1870 = vrot.slane %v1832, %v1869
          %v1871 = vlaneseq
          %v1872 = vshrl.u32 %v1871, 7
          %v1873 = vsub.s32 1, %v1872
          %v1874 = vrot.slane %v1832, %v1873
          %v1885 = vpack.c.bf16 %v1838, %v1838
          %v1886 = vpack.c.bf16 %v1842, %v1842
          %v1887 = vpack.c.bf16 %v1846, %v1846
          %v1888 = vpack.c.bf16 %v1850, %v1850
          %v1889 = vpack.c.bf16 %v1854, %v1854
          %v1890 = vpack.c.bf16 %v1858, %v1858
          %v1891 = vpack.c.bf16 %v1862, %v1862
          %v1892 = vpack.c.bf16 %v1866, %v1866
          %v1893 = vpack.c.bf16 %v1870, %v1870
          %v1894 = vpack.c.bf16 %v1874, %v1874
          %v1895 = vld [vmem:[%s5] sm:$0xf]
          %v1896 = vld [vmem:[%s5 + $0x4] sm:$0xf]
          %v1897 = vld [vmem:[%s5 + $0x8] sm:$0xf]
          %v1898 = vld [vmem:[%s5 + $0xc] sm:$0xf]
          %v1899 = vld [vmem:[%s5 + $0x10] sm:$0xf]
          %v1900 = vld [vmem:[%s5 + $0x14] sm:$0xf]
          %v1901 = vld [vmem:[%s5 + $0x18] sm:$0xf]
          %v1902 = vld [vmem:[%s5 + $0x1c] sm:$0xf]
          %v1903 = vld [vmem:[%s5 + $0x20] sm:$0xf]
          %v1904 = vld [vmem:[%s5 + $0x24] sm:$0xf]
          %v1905 = vld [vmem:[%s5 + $0x28] sm:$0xf]
          %v1906 = vld [vmem:[%s5 + $0x2c] sm:$0xf]
          %v1907 = vld [vmem:[%s5 + $0x30] sm:$0xf]
          %v1908 = vld [vmem:[%s5 + $0x34] sm:$0xf]
          %v1909 = vld [vmem:[%s5 + $0x38] sm:$0xf]
          %v1910 = vld [vmem:[%s5 + $0x3c] sm:$0xf]
          %v1911 = vld [vmem:[%s5 + $0x40] sm:$0xf]
          %v1912 = vld [vmem:[%s5 + $0x44] sm:$0xf]
          %v1913 = vld [vmem:[%s5 + $0x48] sm:$0xf]
          %v1914 = vld [vmem:[%s5 + $0x4c] sm:$0xf]
          %v1915 = vld [vmem:[%s5 + $0x50] sm:$0xf]
          %v1916 = vld [vmem:[%s5 + $0x54] sm:$0xf]
          %v1917 = vld [vmem:[%s5 + $0x58] sm:$0xf]
          %v1918 = vld [vmem:[%s5 + $0x5c] sm:$0xf]
          %v1919 = vld [vmem:[%s5 + $0x60] sm:$0xf]
          %v1920 = vld [vmem:[%s5 + $0x64] sm:$0xf]
          %v1921 = vld [vmem:[%s5 + $0x68] sm:$0xf]
          %v1922 = vld [vmem:[%s5 + $0x6c] sm:$0xf]
          %v1923 = vld [vmem:[%s5 + $0x70] sm:$0xf]
          %v1924 = vld [vmem:[%s5 + $0x74] sm:$0xf]
          %v1925 = vld [vmem:[%s5 + $0x78] sm:$0xf]
          %v1926 = vld [vmem:[%s5 + $0x7c] sm:$0xf]
          %v1927 = vld [vmem:[%s5 + $0x80] sm:$0xf]
          %v1928 = vld [vmem:[%s5 + $0x84] sm:$0xf]
          %v1929 = vld [vmem:[%s5 + $0x88] sm:$0xf]
          %v1930 = vld [vmem:[%s5 + $0x8c] sm:$0xf]
          %v1931 = vld [vmem:[%s5 + $0x90] sm:$0xf]
          %v1932 = vld [vmem:[%s5 + $0x94] sm:$0xf]
          %v1933 = vld [vmem:[%s5 + $0x98] sm:$0xf]
          %v1934 = vld [vmem:[%s5 + $0x9c] sm:$0xf]
          %v1935 = vld [vmem:[%s5 + $0xa0] sm:$0xf]
          %v1936 = vld [vmem:[%s5 + $0xa4] sm:$0xf]
          %v1937 = vld [vmem:[%s5 + $0xa8] sm:$0xf]
          %v1938 = vld [vmem:[%s5 + $0xac] sm:$0xf]
          %v1939 = vld [vmem:[%s5 + $0xb0] sm:$0xf]
          %v1940 = vld [vmem:[%s5 + $0xb4] sm:$0xf]
          %v1941 = vld [vmem:[%s5 + $0xb8] sm:$0xf]
          %v1942 = vld [vmem:[%s5 + $0xbc] sm:$0xf]
          %v1943 = vld [vmem:[%s5 + $0xc0] sm:$0xf]
          %v1944 = vld [vmem:[%s5 + $0xc4] sm:$0xf]
          %v1945 = vld [vmem:[%s5 + $0xc8] sm:$0xf]
          %v1946 = vld [vmem:[%s5 + $0xcc] sm:$0xf]
          %v1947 = vld [vmem:[%s5 + $0xd0] sm:$0xf]
          %v1948 = vld [vmem:[%s5 + $0xd4] sm:$0xf]
          %v1949 = vld [vmem:[%s5 + $0xd8] sm:$0xf]
          %v1950 = vld [vmem:[%s5 + $0xdc] sm:$0xf]
          %v1951 = vld [vmem:[%s5 + $0xe0] sm:$0xf]
          %v1952 = vld [vmem:[%s5 + $0xe4] sm:$0xf]
          %v1953 = vld [vmem:[%s5 + $0xe8] sm:$0xf]
          %v1954 = vld [vmem:[%s5 + $0xec] sm:$0xf]
          %v1955 = vld [vmem:[%s5 + $0xf0] sm:$0xf]
          %v1956 = vld [vmem:[%s5 + $0xf4] sm:$0xf]
          %v1957 = vld [vmem:[%s5 + $0xf8] sm:$0xf]
          %v1958 = vld [vmem:[%s5 + $0xfc] sm:$0xf]
          %v1959 = vld [vmem:[%s5 + $0x100] sm:$0xf]
          %v1960 = vld [vmem:[%s5 + $0x104] sm:$0xf]
          %v1961 = vld [vmem:[%s5 + $0x108] sm:$0xf]
          %v1962 = vld [vmem:[%s5 + $0x10c] sm:$0xf]
          %v1963 = vld [vmem:[%s5 + $0x110] sm:$0xf]
          %v1964 = vld [vmem:[%s5 + $0x114] sm:$0xf]
          %v1965 = vld [vmem:[%s5 + $0x118] sm:$0xf]
          %v1966 = vld [vmem:[%s5 + $0x11c] sm:$0xf]
          %v1967 = vld [vmem:[%s5 + $0x120] sm:$0xf]
          %v1968 = vld [vmem:[%s5 + $0x124] sm:$0xf]
          %v1969 = vld [vmem:[%s5 + $0x128] sm:$0xf]
          %v1970 = vld [vmem:[%s5 + $0x12c] sm:$0xf]
          %v1971 = vld [vmem:[%s5 + $0x130] sm:$0xf]
          %v1972 = vld [vmem:[%s5 + $0x134] sm:$0xf]
          %v1973 = vld [vmem:[%s5 + $0x138] sm:$0xf]
          %v1974 = vld [vmem:[%s5 + $0x13c] sm:$0xf]
          %v1975 = vld [vmem:[%s5 + $0x140] sm:$0xf]
          %v1976 = vld [vmem:[%s5 + $0x144] sm:$0xf]
          %v1977 = vld [vmem:[%s5 + $0x148] sm:$0xf]
          %v1978 = vld [vmem:[%s5 + $0x14c] sm:$0xf]
          %v1979 = vld [vmem:[%s5 + $0x150] sm:$0xf]
          %v1980 = vld [vmem:[%s5 + $0x154] sm:$0xf]
          %v1981 = vld [vmem:[%s5 + $0x158] sm:$0xf]
          %v1982 = vld [vmem:[%s5 + $0x15c] sm:$0xf]
          %v1983 = vld [vmem:[%s5 + $0x160] sm:$0xf]
          %v1984 = vld [vmem:[%s5 + $0x164] sm:$0xf]
          %v1985 = vld [vmem:[%s5 + $0x168] sm:$0xf]
          %v1986 = vld [vmem:[%s5 + $0x16c] sm:$0xf]
          %v1987 = vld [vmem:[%s5 + $0x170] sm:$0xf]
          %v1988 = vld [vmem:[%s5 + $0x174] sm:$0xf]
          %v1989 = vld [vmem:[%s5 + $0x178] sm:$0xf]
          %v1990 = vld [vmem:[%s5 + $0x17c] sm:$0xf]
          %v1991 = vld [vmem:[%s5 + $0x180] sm:$0xf]
          %v1992 = vld [vmem:[%s5 + $0x184] sm:$0xf]
          %v1993 = vld [vmem:[%s5 + $0x188] sm:$0xf]
          %v1994 = vld [vmem:[%s5 + $0x18c] sm:$0xf]
          %v1995 = vld [vmem:[%s5 + $0x190] sm:$0xf]
          %v1996 = vld [vmem:[%s5 + $0x194] sm:$0xf]
          %v1997 = vld [vmem:[%s5 + $0x198] sm:$0xf]
          %v1998 = vld [vmem:[%s5 + $0x19c] sm:$0xf]
          %v1999 = vld [vmem:[%s5 + $0x1a0] sm:$0xf]
          %v2000 = vld [vmem:[%s5 + $0x1a4] sm:$0xf]
          %v2001 = vld [vmem:[%s5 + $0x1a8] sm:$0xf]
          %v2002 = vld [vmem:[%s5 + $0x1ac] sm:$0xf]
          %v2003 = vld [vmem:[%s5 + $0x1b0] sm:$0xf]
          %v2004 = vld [vmem:[%s5 + $0x1b4] sm:$0xf]
          %v2005 = vld [vmem:[%s5 + $0x1b8] sm:$0xf]
          %v2006 = vld [vmem:[%s5 + $0x1bc] sm:$0xf]
          %v2007 = vld [vmem:[%s5 + $0x1c0] sm:$0xf]
          %v2008 = vld [vmem:[%s5 + $0x1c4] sm:$0xf]
          %v2009 = vld [vmem:[%s5 + $0x1c8] sm:$0xf]
          %v2010 = vld [vmem:[%s5 + $0x1cc] sm:$0xf]
          %v2011 = vld [vmem:[%s5 + $0x1d0] sm:$0xf]
          %v2012 = vld [vmem:[%s5 + $0x1d4] sm:$0xf]
          %v2013 = vld [vmem:[%s5 + $0x1d8] sm:$0xf]
          %v2014 = vld [vmem:[%s5 + $0x1dc] sm:$0xf]
          %v2015 = vld [vmem:[%s5 + $0x1e0] sm:$0xf]
          %v2016 = vld [vmem:[%s5 + $0x1e4] sm:$0xf]
          %v2017 = vld [vmem:[%s5 + $0x1e8] sm:$0xf]
          %v2018 = vld [vmem:[%s5 + $0x1ec] sm:$0xf]
          %v2019 = vld [vmem:[%s5 + $0x1f0] sm:$0xf]
          %v2020 = vld [vmem:[%s5 + $0x1f4] sm:$0xf]
          %v2021 = vld [vmem:[%s5 + $0x1f8] sm:$0xf]
          %v2022 = vld [vmem:[%s5 + $0x1fc] sm:$0xf]
          %v2023 = vld [vmem:[%s5 + $0x200] sm:$0xf]
          %v2024 = vld [vmem:[%s5 + $0x204] sm:$0xf]
          %v2025 = vld [vmem:[%s5 + $0x208] sm:$0xf]
          %v2026 = vld [vmem:[%s5 + $0x20c] sm:$0xf]
          %v2027 = vld [vmem:[%s5 + $0x210] sm:$0xf]
          %v2028 = vld [vmem:[%s5 + $0x214] sm:$0xf]
          %v2029 = vld [vmem:[%s5 + $0x218] sm:$0xf]
          %v2030 = vld [vmem:[%s5 + $0x21c] sm:$0xf]
          %v2031 = vld [vmem:[%s5 + $0x220] sm:$0xf]
          %v2032 = vld [vmem:[%s5 + $0x224] sm:$0xf]
          %v2033 = vld [vmem:[%s5 + $0x228] sm:$0xf]
          %v2034 = vld [vmem:[%s5 + $0x22c] sm:$0xf]
          %v2035 = vld [vmem:[%s5 + $0x230] sm:$0xf]
          %v2036 = vld [vmem:[%s5 + $0x234] sm:$0xf]
          %v2037 = vld [vmem:[%s5 + $0x238] sm:$0xf]
          %v2038 = vld [vmem:[%s5 + $0x23c] sm:$0xf]
          %v2039 = vld [vmem:[%s5 + $0x240] sm:$0xf]
          %v2040 = vld [vmem:[%s5 + $0x244] sm:$0xf]
          %v2041 = vld [vmem:[%s5 + $0x248] sm:$0xf]
          %v2042 = vld [vmem:[%s5 + $0x24c] sm:$0xf]
          %v2043 = vld [vmem:[%s5 + $0x250] sm:$0xf]
          %v2044 = vld [vmem:[%s5 + $0x254] sm:$0xf]
          %v2045 = vld [vmem:[%s5 + $0x258] sm:$0xf]
          %v2046 = vld [vmem:[%s5 + $0x25c] sm:$0xf]
          %v2047 = vld [vmem:[%s5 + $0x260] sm:$0xf]
          %v2048 = vld [vmem:[%s5 + $0x264] sm:$0xf]
          %v2049 = vld [vmem:[%s5 + $0x268] sm:$0xf]
          %v2050 = vld [vmem:[%s5 + $0x26c] sm:$0xf]
          %v2051 = vld [vmem:[%s5 + $0x270] sm:$0xf]
          %v2052 = vld [vmem:[%s5 + $0x274] sm:$0xf]
          %v2053 = vld [vmem:[%s5 + $0x278] sm:$0xf]
          %v2054 = vld [vmem:[%s5 + $0x27c] sm:$0xf]
          %v2055 = vld [vmem:[%s6] sm:$0x1]
          %v2216 = vunpack.c.l.b16 %v1895
          %v2217 = vunpack.c.l.b16 %v1896
          %v2218 = vunpack.c.l.b16 %v1897
          %v2219 = vunpack.c.l.b16 %v1898
          %v2220 = vunpack.c.l.b16 %v1899
          %v2221 = vunpack.c.l.b16 %v1900
          %v2222 = vunpack.c.l.b16 %v1901
          %v2223 = vunpack.c.l.b16 %v1902
          %v2224 = vunpack.c.l.b16 %v1903
          %v2225 = vunpack.c.l.b16 %v1904
          %v2226 = vunpack.c.l.b16 %v1905
          %v2227 = vunpack.c.l.b16 %v1906
          %v2228 = vunpack.c.l.b16 %v1907
          %v2229 = vunpack.c.l.b16 %v1908
          %v2230 = vunpack.c.l.b16 %v1909
          %v2231 = vunpack.c.l.b16 %v1910
          %v2232 = vunpack.c.l.b16 %v1911
          %v2233 = vunpack.c.l.b16 %v1912
          %v2234 = vunpack.c.l.b16 %v1913
          %v2235 = vunpack.c.l.b16 %v1914
          %v2236 = vunpack.c.l.b16 %v1915
          %v2237 = vunpack.c.l.b16 %v1916
          %v2238 = vunpack.c.l.b16 %v1917
          %v2239 = vunpack.c.l.b16 %v1918
          %v2240 = vunpack.c.l.b16 %v1919
          %v2241 = vunpack.c.l.b16 %v1920
          %v2242 = vunpack.c.l.b16 %v1921
          %v2243 = vunpack.c.l.b16 %v1922
          %v2244 = vunpack.c.l.b16 %v1923
          %v2245 = vunpack.c.l.b16 %v1924
          %v2246 = vunpack.c.l.b16 %v1925
          %v2247 = vunpack.c.l.b16 %v1926
          %v2248 = vunpack.c.l.b16 %v1927
          %v2249 = vunpack.c.l.b16 %v1928
          %v2250 = vunpack.c.l.b16 %v1929
          %v2251 = vunpack.c.l.b16 %v1930
          %v2252 = vunpack.c.l.b16 %v1931
          %v2253 = vunpack.c.l.b16 %v1932
          %v2254 = vunpack.c.l.b16 %v1933
          %v2255 = vunpack.c.l.b16 %v1934
          %v2256 = vunpack.c.l.b16 %v1935
          %v2257 = vunpack.c.l.b16 %v1936
          %v2258 = vunpack.c.l.b16 %v1937
          %v2259 = vunpack.c.l.b16 %v1938
          %v2260 = vunpack.c.l.b16 %v1939
          %v2261 = vunpack.c.l.b16 %v1940
          %v2262 = vunpack.c.l.b16 %v1941
          %v2263 = vunpack.c.l.b16 %v1942
          %v2264 = vunpack.c.l.b16 %v1943
          %v2265 = vunpack.c.l.b16 %v1944
          %v2266 = vunpack.c.l.b16 %v1945
          %v2267 = vunpack.c.l.b16 %v1946
          %v2268 = vunpack.c.l.b16 %v1947
          %v2269 = vunpack.c.l.b16 %v1948
          %v2270 = vunpack.c.l.b16 %v1949
          %v2271 = vunpack.c.l.b16 %v1950
          %v2272 = vunpack.c.l.b16 %v1951
          %v2273 = vunpack.c.l.b16 %v1952
          %v2274 = vunpack.c.l.b16 %v1953
          %v2275 = vunpack.c.l.b16 %v1954
          %v2276 = vunpack.c.l.b16 %v1955
          %v2277 = vunpack.c.l.b16 %v1956
          %v2278 = vunpack.c.l.b16 %v1957
          %v2279 = vunpack.c.l.b16 %v1958
          %v2280 = vunpack.c.l.b16 %v1959
          %v2281 = vunpack.c.l.b16 %v1960
          %v2282 = vunpack.c.l.b16 %v1961
          %v2283 = vunpack.c.l.b16 %v1962
          %v2284 = vunpack.c.l.b16 %v1963
          %v2285 = vunpack.c.l.b16 %v1964
          %v2286 = vunpack.c.l.b16 %v1965
          %v2287 = vunpack.c.l.b16 %v1966
          %v2288 = vunpack.c.l.b16 %v1967
          %v2289 = vunpack.c.l.b16 %v1968
          %v2290 = vunpack.c.l.b16 %v1969
          %v2291 = vunpack.c.l.b16 %v1970
          %v2292 = vunpack.c.l.b16 %v1971
          %v2293 = vunpack.c.l.b16 %v1972
          %v2294 = vunpack.c.l.b16 %v1973
          %v2295 = vunpack.c.l.b16 %v1974
          %v2296 = vunpack.c.l.b16 %v1975
          %v2297 = vunpack.c.l.b16 %v1976
          %v2298 = vunpack.c.l.b16 %v1977
          %v2299 = vunpack.c.l.b16 %v1978
          %v2300 = vunpack.c.l.b16 %v1979
          %v2301 = vunpack.c.l.b16 %v1980
          %v2302 = vunpack.c.l.b16 %v1981
          %v2303 = vunpack.c.l.b16 %v1982
          %v2304 = vunpack.c.l.b16 %v1983
          %v2305 = vunpack.c.l.b16 %v1984
          %v2306 = vunpack.c.l.b16 %v1985
          %v2307 = vunpack.c.l.b16 %v1986
          %v2308 = vunpack.c.l.b16 %v1987
          %v2309 = vunpack.c.l.b16 %v1988
          %v2310 = vunpack.c.l.b16 %v1989
          %v2311 = vunpack.c.l.b16 %v1990
          %v2312 = vunpack.c.l.b16 %v1991
          %v2313 = vunpack.c.l.b16 %v1992
          %v2314 = vunpack.c.l.b16 %v1993
          %v2315 = vunpack.c.l.b16 %v1994
          %v2316 = vunpack.c.l.b16 %v1995
          %v2317 = vunpack.c.l.b16 %v1996
          %v2318 = vunpack.c.l.b16 %v1997
          %v2319 = vunpack.c.l.b16 %v1998
          %v2320 = vunpack.c.l.b16 %v1999
          %v2321 = vunpack.c.l.b16 %v2000
          %v2322 = vunpack.c.l.b16 %v2001
          %v2323 = vunpack.c.l.b16 %v2002
          %v2324 = vunpack.c.l.b16 %v2003
          %v2325 = vunpack.c.l.b16 %v2004
          %v2326 = vunpack.c.l.b16 %v2005
          %v2327 = vunpack.c.l.b16 %v2006
          %v2328 = vunpack.c.l.b16 %v2007
          %v2329 = vunpack.c.l.b16 %v2008
          %v2330 = vunpack.c.l.b16 %v2009
          %v2331 = vunpack.c.l.b16 %v2010
          %v2332 = vunpack.c.l.b16 %v2011
          %v2333 = vunpack.c.l.b16 %v2012
          %v2334 = vunpack.c.l.b16 %v2013
          %v2335 = vunpack.c.l.b16 %v2014
          %v2336 = vunpack.c.l.b16 %v2015
          %v2337 = vunpack.c.l.b16 %v2016
          %v2338 = vunpack.c.l.b16 %v2017
          %v2339 = vunpack.c.l.b16 %v2018
          %v2340 = vunpack.c.l.b16 %v2019
          %v2341 = vunpack.c.l.b16 %v2020
          %v2342 = vunpack.c.l.b16 %v2021
          %v2343 = vunpack.c.l.b16 %v2022
          %v2344 = vunpack.c.l.b16 %v2023
          %v2345 = vunpack.c.l.b16 %v2024
          %v2346 = vunpack.c.l.b16 %v2025
          %v2347 = vunpack.c.l.b16 %v2026
          %v2348 = vunpack.c.l.b16 %v2027
          %v2349 = vunpack.c.l.b16 %v2028
          %v2350 = vunpack.c.l.b16 %v2029
          %v2351 = vunpack.c.l.b16 %v2030
          %v2352 = vunpack.c.l.b16 %v2031
          %v2353 = vunpack.c.l.b16 %v2032
          %v2354 = vunpack.c.l.b16 %v2033
          %v2355 = vunpack.c.l.b16 %v2034
          %v2356 = vunpack.c.l.b16 %v2035
          %v2357 = vunpack.c.l.b16 %v2036
          %v2358 = vunpack.c.l.b16 %v2037
          %v2359 = vunpack.c.l.b16 %v2038
          %v2360 = vunpack.c.l.b16 %v2039
          %v2361 = vunpack.c.l.b16 %v2040
          %v2362 = vunpack.c.l.b16 %v2041
          %v2363 = vunpack.c.l.b16 %v2042
          %v2364 = vunpack.c.l.b16 %v2043
          %v2365 = vunpack.c.l.b16 %v2044
          %v2366 = vunpack.c.l.b16 %v2045
          %v2367 = vunpack.c.l.b16 %v2046
          %v2368 = vunpack.c.l.b16 %v2047
          %v2369 = vunpack.c.l.b16 %v2048
          %v2370 = vunpack.c.l.b16 %v2049
          %v2371 = vunpack.c.l.b16 %v2050
          %v2372 = vunpack.c.l.b16 %v2051
          %v2373 = vunpack.c.l.b16 %v2052
          %v2374 = vunpack.c.l.b16 %v2053
          %v2375 = vunpack.c.l.b16 %v2054
          %v2376 = vpack.c.b16 %v2217, %v2216
          %v2377 = vpack.c.b16 %v2219, %v2218
          %v2378 = vpack.c.b16 %v2221, %v2220
          %v2379 = vpack.c.b16 %v2223, %v2222
          %v2380 = vpack.c.b16 %v2225, %v2224
          %v2381 = vpack.c.b16 %v2227, %v2226
          %v2382 = vpack.c.b16 %v2229, %v2228
          %v2383 = vpack.c.b16 %v2231, %v2230
          %v2384 = vpack.c.b16 %v2233, %v2232
          %v2385 = vpack.c.b16 %v2235, %v2234
          %v2386 = vpack.c.b16 %v2237, %v2236
          %v2387 = vpack.c.b16 %v2239, %v2238
          %v2388 = vpack.c.b16 %v2241, %v2240
          %v2389 = vpack.c.b16 %v2243, %v2242
          %v2390 = vpack.c.b16 %v2245, %v2244
          %v2391 = vpack.c.b16 %v2247, %v2246
          %v2392 = vpack.c.b16 %v2249, %v2248
          %v2393 = vpack.c.b16 %v2251, %v2250
          %v2394 = vpack.c.b16 %v2253, %v2252
          %v2395 = vpack.c.b16 %v2255, %v2254
          %v2396 = vpack.c.b16 %v2257, %v2256
          %v2397 = vpack.c.b16 %v2259, %v2258
          %v2398 = vpack.c.b16 %v2261, %v2260
          %v2399 = vpack.c.b16 %v2263, %v2262
          %v2400 = vpack.c.b16 %v2265, %v2264
          %v2401 = vpack.c.b16 %v2267, %v2266
          %v2402 = vpack.c.b16 %v2269, %v2268
          %v2403 = vpack.c.b16 %v2271, %v2270
          %v2404 = vpack.c.b16 %v2273, %v2272
          %v2405 = vpack.c.b16 %v2275, %v2274
          %v2406 = vpack.c.b16 %v2277, %v2276
          %v2407 = vpack.c.b16 %v2279, %v2278
          %v2408 = vpack.c.b16 %v2281, %v2280
          %v2409 = vpack.c.b16 %v2283, %v2282
          %v2410 = vpack.c.b16 %v2285, %v2284
          %v2411 = vpack.c.b16 %v2287, %v2286
          %v2412 = vpack.c.b16 %v2289, %v2288
          %v2413 = vpack.c.b16 %v2291, %v2290
          %v2414 = vpack.c.b16 %v2293, %v2292
          %v2415 = vpack.c.b16 %v2295, %v2294
          %v2416 = vpack.c.b16 %v2297, %v2296
          %v2417 = vpack.c.b16 %v2299, %v2298
          %v2418 = vpack.c.b16 %v2301, %v2300
          %v2419 = vpack.c.b16 %v2303, %v2302
          %v2420 = vpack.c.b16 %v2305, %v2304
          %v2421 = vpack.c.b16 %v2307, %v2306
          %v2422 = vpack.c.b16 %v2309, %v2308
          %v2423 = vpack.c.b16 %v2311, %v2310
          %v2424 = vpack.c.b16 %v2313, %v2312
          %v2425 = vpack.c.b16 %v2315, %v2314
          %v2426 = vpack.c.b16 %v2317, %v2316
          %v2427 = vpack.c.b16 %v2319, %v2318
          %v2428 = vpack.c.b16 %v2321, %v2320
          %v2429 = vpack.c.b16 %v2323, %v2322
          %v2430 = vpack.c.b16 %v2325, %v2324
          %v2431 = vpack.c.b16 %v2327, %v2326
          %v2432 = vpack.c.b16 %v2329, %v2328
          %v2433 = vpack.c.b16 %v2331, %v2330
          %v2434 = vpack.c.b16 %v2333, %v2332
          %v2435 = vpack.c.b16 %v2335, %v2334
          %v2436 = vpack.c.b16 %v2337, %v2336
          %v2437 = vpack.c.b16 %v2339, %v2338
          %v2438 = vpack.c.b16 %v2341, %v2340
          %v2439 = vpack.c.b16 %v2343, %v2342
          %v2440 = vpack.c.b16 %v2345, %v2344
          %v2441 = vpack.c.b16 %v2347, %v2346
          %v2442 = vpack.c.b16 %v2349, %v2348
          %v2443 = vpack.c.b16 %v2351, %v2350
          %v2444 = vpack.c.b16 %v2353, %v2352
          %v2445 = vpack.c.b16 %v2355, %v2354
          %v2446 = vpack.c.b16 %v2357, %v2356
          %v2447 = vpack.c.b16 %v2359, %v2358
          %v2448 = vpack.c.b16 %v2361, %v2360
          %v2449 = vpack.c.b16 %v2363, %v2362
          %v2450 = vpack.c.b16 %v2365, %v2364
          %v2451 = vpack.c.b16 %v2367, %v2366
          %v2452 = vpack.c.b16 %v2369, %v2368
          %v2453 = vpack.c.b16 %v2371, %v2370
          %v2454 = vpack.c.b16 %v2373, %v2372
          %v2455 = vpack.c.b16 %v2375, %v2374
          %2536 = vmatprep.subr.bf16.mxu0 0
          %2537 = vmatpush1.bf16.msra.mxu0 %v2376
          %2538 = vmatprep.subr.bf16.mxu0 0
          %2539 = vmatpush1.bf16.msra.mxu0 %v2377
          %2540 = vmatprep.subr.bf16.mxu0 0
          %2541 = vmatpush1.bf16.msra.mxu0 %v2378
          %2542 = vmatprep.subr.bf16.mxu0 0
          %2543 = vmatpush1.bf16.msra.mxu0 %v2379
          %2544 = vmatprep.subr.bf16.mxu0 0
          %2545 = vmatpush1.bf16.msra.mxu0 %v2380
          %2546 = vmatprep.subr.bf16.mxu0 0
          %2547 = vmatpush1.bf16.msra.mxu0 %v2381
          %2548 = vmatprep.subr.bf16.mxu0 0
          %2549 = vmatpush1.bf16.msra.mxu0 %v2382
          %2550 = vmatprep.subr.bf16.mxu0 0
          %2551 = vmatpush1.bf16.msra.mxu0 %v2383
          %2552 = vmatprep.subr.bf16.mxu0 0
          %2553 = vmatpush1.bf16.msra.mxu0 %v2384
          %2554 = vmatprep.subr.bf16.mxu0 0
          %2555 = vmatpush1.bf16.msra.mxu0 %v2385
          %2556 = vmatprep.subr.bf16.mxu0 0
          %2557 = vmatpush1.bf16.msra.mxu0 %v2386
          %2558 = vmatprep.subr.bf16.mxu0 0
          %2559 = vmatpush1.bf16.msra.mxu0 %v2387
          %2560 = vmatprep.subr.bf16.mxu0 0
          %2561 = vmatpush1.bf16.msra.mxu0 %v2388
          %2562 = vmatprep.subr.bf16.mxu0 0
          %2563 = vmatpush1.bf16.msra.mxu0 %v2389
          %2564 = vmatprep.subr.bf16.mxu0 0
          %2565 = vmatpush1.bf16.msra.mxu0 %v2390
          %2566 = vmatprep.subr.bf16.mxu0 0
          %2567 = vmatpush1.bf16.msra.mxu0 %v2391
          %2568 = vmatprep.mubr.bf16.mxu0 %v1886
          %2569 = vmatmul.mubr.bf16.gmra.mrb[0].mxu0 %v1885
          %v2570 = vpop.f32.mrb[0].mxu0
          %v2571 = vadd.f32 %v2055, %v2570
          %v2572 = vpop.f32.mrb[0].mxu0
          %v2573 = vpop.f32.mrb[0].mxu0
          %v2574 = vpop.f32.mrb[0].mxu0
          %2575 = vdwg.mxu0
          %2576 = vmatprep.subr.bf16.mxu0 0
          %2577 = vmatpush1.bf16.msra.mxu0 %v2392
          %2578 = vmatprep.subr.bf16.mxu0 0
          %2579 = vmatpush1.bf16.msra.mxu0 %v2393
          %2580 = vmatprep.subr.bf16.mxu0 0
          %2581 = vmatpush1.bf16.msra.mxu0 %v2394
          %2582 = vmatprep.subr.bf16.mxu0 0
          %2583 = vmatpush1.bf16.msra.mxu0 %v2395
          %2584 = vmatprep.subr.bf16.mxu0 0
          %2585 = vmatpush1.bf16.msra.mxu0 %v2396
          %2586 = vmatprep.subr.bf16.mxu0 0
          %2587 = vmatpush1.bf16.msra.mxu0 %v2397
          %2588 = vmatprep.subr.bf16.mxu0 0
          %2589 = vmatpush1.bf16.msra.mxu0 %v2398
          %2590 = vmatprep.subr.bf16.mxu0 0
          %2591 = vmatpush1.bf16.msra.mxu0 %v2399
          %2592 = vmatprep.subr.bf16.mxu0 0
          %2593 = vmatpush1.bf16.msra.mxu0 %v2400
          %2594 = vmatprep.subr.bf16.mxu0 0
          %2595 = vmatpush1.bf16.msra.mxu0 %v2401
          %2596 = vmatprep.subr.bf16.mxu0 0
          %2597 = vmatpush1.bf16.msra.mxu0 %v2402
          %2598 = vmatprep.subr.bf16.mxu0 0
          %2599 = vmatpush1.bf16.msra.mxu0 %v2403
          %2600 = vmatprep.subr.bf16.mxu0 0
          %2601 = vmatpush1.bf16.msra.mxu0 %v2404
          %2602 = vmatprep.subr.bf16.mxu0 0
          %2603 = vmatpush1.bf16.msra.mxu0 %v2405
          %2604 = vmatprep.subr.bf16.mxu0 0
          %2605 = vmatpush1.bf16.msra.mxu0 %v2406
          %2606 = vmatprep.subr.bf16.mxu0 0
          %2607 = vmatpush1.bf16.msra.mxu0 %v2407
          %2608 = vmatprep.mubr.bf16.mxu0 %v1888
          %2609 = vmatmul.mubr.bf16.gmra.mrb[0].mxu0 %v1887
          %v2610 = vpop.f32.mrb[0].mxu0
          %v2611 = vadd.f32 %v2571, %v2610
          %v2612 = vpop.f32.mrb[0].mxu0
          %v2613 = vpop.f32.mrb[0].mxu0
          %v2614 = vpop.f32.mrb[0].mxu0
          %2615 = vdwg.mxu0
          %2616 = vmatprep.subr.bf16.mxu0 0
          %2617 = vmatpush1.bf16.msra.mxu0 %v2408
          %2618 = vmatprep.subr.bf16.mxu0 0
          %2619 = vmatpush1.bf16.msra.mxu0 %v2409
          %2620 = vmatprep.subr.bf16.mxu0 0
          %2621 = vmatpush1.bf16.msra.mxu0 %v2410
          %2622 = vmatprep.subr.bf16.mxu0 0
          %2623 = vmatpush1.bf16.msra.mxu0 %v2411
          %2624 = vmatprep.subr.bf16.mxu0 0
          %2625 = vmatpush1.bf16.msra.mxu0 %v2412
          %2626 = vmatprep.subr.bf16.mxu0 0
          %2627 = vmatpush1.bf16.msra.mxu0 %v2413
          %2628 = vmatprep.subr.bf16.mxu0 0
          %2629 = vmatpush1.bf16.msra.mxu0 %v2414
          %2630 = vmatprep.subr.bf16.mxu0 0
          %2631 = vmatpush1.bf16.msra.mxu0 %v2415
          %2632 = vmatprep.subr.bf16.mxu0 0
          %2633 = vmatpush1.bf16.msra.mxu0 %v2416
          %2634 = vmatprep.subr.bf16.mxu0 0
          %2635 = vmatpush1.bf16.msra.mxu0 %v2417
          %2636 = vmatprep.subr.bf16.mxu0 0
          %2637 = vmatpush1.bf16.msra.mxu0 %v2418
          %2638 = vmatprep.subr.bf16.mxu0 0
          %2639 = vmatpush1.bf16.msra.mxu0 %v2419
          %2640 = vmatprep.subr.bf16.mxu0 0
          %2641 = vmatpush1.bf16.msra.mxu0 %v2420
          %2642 = vmatprep.subr.bf16.mxu0 0
          %2643 = vmatpush1.bf16.msra.mxu0 %v2421
          %2644 = vmatprep.subr.bf16.mxu0 0
          %2645 = vmatpush1.bf16.msra.mxu0 %v2422
          %2646 = vmatprep.subr.bf16.mxu0 0
          %2647 = vmatpush1.bf16.msra.mxu0 %v2423
          %2648 = vmatprep.mubr.bf16.mxu0 %v1890
          %2649 = vmatmul.mubr.bf16.gmra.mrb[0].mxu0 %v1889
          %v2650 = vpop.f32.mrb[0].mxu0
          %v2651 = vadd.f32 %v2611, %v2650
          %v2652 = vpop.f32.mrb[0].mxu0
          %v2653 = vpop.f32.mrb[0].mxu0
          %v2654 = vpop.f32.mrb[0].mxu0
          %2655 = vdwg.mxu0
          %2656 = vmatprep.subr.bf16.mxu0 0
          %2657 = vmatpush1.bf16.msra.mxu0 %v2424
          %2658 = vmatprep.subr.bf16.mxu0 0
          %2659 = vmatpush1.bf16.msra.mxu0 %v2425
          %2660 = vmatprep.subr.bf16.mxu0 0
          %2661 = vmatpush1.bf16.msra.mxu0 %v2426
          %2662 = vmatprep.subr.bf16.mxu0 0
          %2663 = vmatpush1.bf16.msra.mxu0 %v2427
          %2664 = vmatprep.subr.bf16.mxu0 0
          %2665 = vmatpush1.bf16.msra.mxu0 %v2428
          %2666 = vmatprep.subr.bf16.mxu0 0
          %2667 = vmatpush1.bf16.msra.mxu0 %v2429
          %2668 = vmatprep.subr.bf16.mxu0 0
          %2669 = vmatpush1.bf16.msra.mxu0 %v2430
          %2670 = vmatprep.subr.bf16.mxu0 0
          %2671 = vmatpush1.bf16.msra.mxu0 %v2431
          %2672 = vmatprep.subr.bf16.mxu0 0
          %2673 = vmatpush1.bf16.msra.mxu0 %v2432
          %2674 = vmatprep.subr.bf16.mxu0 0
          %2675 = vmatpush1.bf16.msra.mxu0 %v2433
          %2676 = vmatprep.subr.bf16.mxu0 0
          %2677 = vmatpush1.bf16.msra.mxu0 %v2434
          %2678 = vmatprep.subr.bf16.mxu0 0
          %2679 = vmatpush1.bf16.msra.mxu0 %v2435
          %2680 = vmatprep.subr.bf16.mxu0 0
          %2681 = vmatpush1.bf16.msra.mxu0 %v2436
          %2682 = vmatprep.subr.bf16.mxu0 0
          %2683 = vmatpush1.bf16.msra.mxu0 %v2437
          %2684 = vmatprep.subr.bf16.mxu0 0
          %2685 = vmatpush1.bf16.msra.mxu0 %v2438
          %2686 = vmatprep.subr.bf16.mxu0 0
          %2687 = vmatpush1.bf16.msra.mxu0 %v2439
          %2688 = vmatprep.mubr.bf16.mxu0 %v1892
          %2689 = vmatmul.mubr.bf16.gmra.mrb[0].mxu0 %v1891
          %v2690 = vpop.f32.mrb[0].mxu0
          %v2691 = vadd.f32 %v2651, %v2690
          %v2692 = vpop.f32.mrb[0].mxu0
          %v2693 = vpop.f32.mrb[0].mxu0
          %v2694 = vpop.f32.mrb[0].mxu0
          %2695 = vdwg.mxu0
          %2696 = vmatprep.subr.bf16.mxu0 0
          %2697 = vmatpush1.bf16.msra.mxu0 %v2440
          %2698 = vmatprep.subr.bf16.mxu0 0
          %2699 = vmatpush1.bf16.msra.mxu0 %v2441
          %2700 = vmatprep.subr.bf16.mxu0 0
          %2701 = vmatpush1.bf16.msra.mxu0 %v2442
          %2702 = vmatprep.subr.bf16.mxu0 0
          %2703 = vmatpush1.bf16.msra.mxu0 %v2443
          %2704 = vmatprep.subr.bf16.mxu0 0
          %2705 = vmatpush1.bf16.msra.mxu0 %v2444
          %2706 = vmatprep.subr.bf16.mxu0 0
          %2707 = vmatpush1.bf16.msra.mxu0 %v2445
          %2708 = vmatprep.subr.bf16.mxu0 0
          %2709 = vmatpush1.bf16.msra.mxu0 %v2446
          %2710 = vmatprep.subr.bf16.mxu0 0
          %2711 = vmatpush1.bf16.msra.mxu0 %v2447
          %2712 = vmatprep.subr.bf16.mxu0 0
          %2713 = vmatpush1.bf16.msra.mxu0 %v2448
          %2714 = vmatprep.subr.bf16.mxu0 0
          %2715 = vmatpush1.bf16.msra.mxu0 %v2449
          %2716 = vmatprep.subr.bf16.mxu0 0
          %2717 = vmatpush1.bf16.msra.mxu0 %v2450
          %2718 = vmatprep.subr.bf16.mxu0 0
          %2719 = vmatpush1.bf16.msra.mxu0 %v2451
          %2720 = vmatprep.subr.bf16.mxu0 0
          %2721 = vmatpush1.bf16.msra.mxu0 %v2452
          %2722 = vmatprep.subr.bf16.mxu0 0
          %2723 = vmatpush1.bf16.msra.mxu0 %v2453
          %2724 = vmatprep.subr.bf16.mxu0 0
          %2725 = vmatpush1.bf16.msra.mxu0 %v2454
          %2726 = vmatprep.subr.bf16.mxu0 0
          %2727 = vmatpush1.bf16.msra.mxu0 %v2455
          %2728 = vmatprep.mubr.bf16.mxu0 %v1894
          %2729 = vmatmul.mubr.bf16.gmra.mrb[0].mxu0 %v1893
          %v2730 = vpop.f32.mrb[0].mxu0
          %v2731 = vadd.f32 %v2691, %v2730
          %v2732 = vpop.f32.mrb[0].mxu0
          %v2733 = vpop.f32.mrb[0].mxu0
          %v2734 = vpop.f32.mrb[0].mxu0
          %2735 = vdwg.mxu0
          %2736 = vst [vmem:[%s288] sm:$0x1] %v2731
        $region56: #{base_model_forward.1} parent=47 // pred_fallthru
          _
        %s2737 = sand.u32 %s195, 1
        %s2738 = scalar_lea.sflag [#allocation4], %s2737
        %s2739 = sand.u32 %s195, 1
        %s2740 = scalar_lea.vmem [#allocation3], %s2739
        // Predicated region
        $region57: #{base_model_forward.1} parent=47 // pred_check
          %p2741 = pneg %p205
        $region58: #{base_model_forward.1} parent=47 // pred_check_branch
          %2743 = sbr.rel (%p2741) target = $region60
        $region59: #{base_model_forward.1} parent=47 // pred_region
          %s2745 = ssub.s32 16, 16
          %2746 = vsyncadd %s2738, %s2745
          %s2747 = smul.addr %s25, 16
          %s2748 = scalar_lea.hbm %s7, %s2747
          %s2750 = sshll.u32 %s2740, 4
          %s2751 = int_to_ptr.vmem [resolvable:$true] %s2750
          %2753 = dma.vmem_to_hbm [thread:$0]  %s2751, 16, %s2748, %s2738
        $region60: #{base_model_forward.1} parent=47 // pred_fallthru
          _
      $region48: #{base_model_forward.1} parent=5 // pred_fallthru
        _
      %p2754 = scmp.le.s32.totalorder 2, %s16
      // Predicated region
      $region61: #{base_model_forward.1} parent=5 // pred_check
        %p2755 = pneg %p2754
      $region62: #{base_model_forward.1} parent=5 // pred_check_branch
        %2757 = sbr.rel (%p2755) target = $region64
      $region63: #{base_model_forward.1} parent=5 // pred_region
        %s2758 = ssub.s32 %s16, 2
        // Predicated region
        $region65: #{base_model_forward.1} parent=63 // pred_check
          %p2759 = pneg %p211
        $region66: #{base_model_forward.1} parent=63 // pred_check_branch
          %2761 = sbr.rel (%p2759) target = $region68
        $region67: #{base_model_forward.1} parent=63 // pred_region
          %s2762 = sand.u32 %s196, 1
          %s2763 = scalar_lea.sflag [#allocation4], %s2762
          %s2764 = sand.u32 %s196, 1
          %s2765 = scalar_lea.vmem [#allocation3], %s2764
          %2766 = dma.done %s2763, 16
        $region68: #{base_model_forward.1} parent=63 // pred_fallthru
          _
      $region64: #{base_model_forward.1} parent=5 // pred_fallthru
        _
    $region6: #{base_model_forward.1} parent=1 // loop_footer
      %s20 = sadd.s32 1, %s16
    $region7: #{base_model_forward.1} parent=1 // loop_footer_branch
      %15 = sbr.rel target = $region3
    $region8: #{base_model_forward.1} parent=1 // loop_exit
      _
    %2767 = vsyncpa [#allocation4], 1
    %s2768 = scalar_lea.sflag [#allocation4], 1
    %2769 = vsyncpa %s2768, 1

</llo_original>
